<compile_context>
chip_gen: v6e
topology: v6e:2x2x1
jax: 0.10.0
libtpu: 0.0.40
codegen_flags: <defaults>
</compile_context>

<pallas_src>
import functools
import math

import jax
import jax.numpy as jnp
import numpy as np
from jax.experimental import pallas as pl
from jax.experimental.pallas import tpu as pltpu

# (cout, kernel, stride) for the 5 backbone convs (cin = obs C or previous cout).
# Static Python config -- never traced.
_CONV_CFG = ((32, 4, 4), (32, 3, 2), (64, 3, 2), (64, 3, 2), (128, 3, 2))
_VMEM_LIMIT = 48 * 1024 * 1024  # comfortably below v7x's 64 MiB physical VMEM


def _mosaic_params(**kwargs):
    """Graceful CompilerParams construction (never raises AttributeError)."""
    cls = getattr(pltpu, "CompilerParams", None) or getattr(pltpu, "TPUCompilerParams", None)
    return cls(**kwargs) if cls is not None else None


def _row_tile(m, tm_max=1024):
    """Row-tile size: full M when tiny, otherwise a 32-row-aligned tile that
    yields >= 2 grid steps (v7x megacore) and <= tm_max rows.  Partial last
    blocks are fine: each output row depends only on its own input row, so the
    out-of-bounds rows of the final block are garbage-in/masked-out.  NOTE:
    this independence assumption must be revisited if patch extraction ever
    moves inside the kernel (cross-row windows)."""
    if m <= 32:
        return m
    half = ((m // 2) + 31) // 32 * 32
    return max(32, min(tm_max, half, m))


# ----------------------------------------------------------------------------
# Kernel 1: fused matmul + bias (+ ReLU), row-tiled.
# bf16 operands, f32 accumulation, f32 epilogue.
# ----------------------------------------------------------------------------
def _linear_kernel(x_ref, w_ref, b_ref, o_ref, *, relu):
    y = jnp.dot(x_ref[...], w_ref[...], preferred_element_type=jnp.float32)
    y = y + b_ref[...]
    if relu:
        y = jnp.maximum(y, 0.0)
    o_ref[...] = y.astype(o_ref.dtype)


def pallas_linear(x, w, b, relu, out_dtype=jnp.float32, tm_max=1024):
    """y = relu?(x @ w + b).  x:(M,K) bf16, w:(K,N) bf16, b:(N,) f32."""
    M, K = x.shape
    K2, N = w.shape
    assert K == K2, (K, K2)
    tm = _row_tile(M, tm_max)
    return pl.pallas_call(
        functools.partial(_linear_kernel, relu=relu),
        out_shape=jax.ShapeDtypeStruct((M, N), out_dtype),
        grid=(pl.cdiv(M, tm),),
        in_specs=[
            pl.BlockSpec((tm, K), lambda i: (i, 0)),
            pl.BlockSpec((K, N), lambda i: (0, 0)),   # weight resident across grid
            pl.BlockSpec((1, N), lambda i: (0, 0)),
        ],
        out_specs=pl.BlockSpec((tm, N), lambda i: (i, 0)),
        compiler_params=_mosaic_params(
            dimension_semantics=("parallel",),
            vmem_limit_bytes=_VMEM_LIMIT,
        ),
    )(x, w, b.reshape(1, N))


# ----------------------------------------------------------------------------
# Kernel 2: fused neck (Linear+ReLU) + concatenated [critic | actor] heads.
# Hidden features stay in VMEM; head output is a 128-lane-dense padded slab.
# ----------------------------------------------------------------------------
def _neck_heads_kernel(f_ref, nw_ref, nb_ref, hw_ref, hb_ref, o_ref):
    h = jnp.dot(f_ref[...], nw_ref[...], preferred_element_type=jnp.float32)
    h = jnp.maximum(h + nb_ref[...], 0.0)                      # f32 epilogue
    h = h.astype(jnp.bfloat16)                                 # bf16 head operand
    y = jnp.dot(h, hw_ref[...], preferred_element_type=jnp.float32) + hb_ref[...]
    o_ref[...] = y.astype(o_ref.dtype)


def pallas_neck_heads(feat, neck_w, neck_b, head_w, head_b, tm_max=1024):
    M, F = feat.shape
    F2, H = neck_w.shape
    H2, Np = head_w.shape
    assert F == F2 and H == H2, (F, F2, H, H2)
    tm = _row_tile(M, tm_max)
    return pl.pallas_call(
        _neck_heads_kernel,
        out_shape=jax.ShapeDtypeStruct((M, Np), jnp.float32),
        grid=(pl.cdiv(M, tm),),
        in_specs=[
            pl.BlockSpec((tm, F), lambda i: (i, 0)),
            pl.BlockSpec((F, H), lambda i: (0, 0)),
            pl.BlockSpec((1, H), lambda i: (0, 0)),
            pl.BlockSpec((H, Np), lambda i: (0, 0)),
            pl.BlockSpec((1, Np), lambda i: (0, 0)),
        ],
        out_specs=pl.BlockSpec((tm, Np), lambda i: (i, 0)),
        compiler_params=_mosaic_params(
            dimension_semantics=("parallel",),
            vmem_limit_bytes=_VMEM_LIMIT,
        ),
    )(feat, neck_w, neck_b.reshape(1, H), head_w, head_b.reshape(1, Np))


# ----------------------------------------------------------------------------
# Patch-matrix construction (XLA glue) + Pallas matmul = conv2d(bias)+ReLU.
# ----------------------------------------------------------------------------
def _space_to_depth_cols(x, k, s, pad):
    """Exact patch matrix for non-overlapping windows (k == s): a pure pad +
    reshape + transpose, zero data duplication."""
    B, H, W, C = x.shape
    Ho = (H + 2 * pad - k) // s + 1
    Wo = (W + 2 * pad - k) // s + 1
    xp = jnp.pad(x, ((0, 0),
                     (pad, max(0, s * Ho - H - pad)),
                     (pad, max(0, s * Wo - W - pad)),
                     (0, 0)))
    xp = xp[:, :s * Ho, :s * Wo, :]
    cols = xp.reshape(B, Ho, s, Wo, s, C).transpose(0, 1, 3, 2, 4, 5)
    cols = cols.reshape(B * Ho * Wo, k * k * C)   # col index = (i*k + j)*C + c
    return cols, Ho, Wo


def _im2col(x, k, s, pad):
    """Generic strided im2col (k != s); ~(k/s)^2 duplication, done in bf16."""
    B, H, W, C = x.shape
    Ho = (H + 2 * pad - k) // s + 1
    Wo = (W + 2 * pad - k) // s + 1
    xp = jnp.pad(x, ((0, 0), (pad, pad), (pad, pad), (0, 0)))
    patches = []
    for i in range(k):
        for j in range(k):
            patches.append(xp[:, i:i + s * Ho:s, j:j + s * Wo:s, :])
    cols = jnp.stack(patches, axis=3)             # (B, Ho, Wo, k*k, C)
    cols = cols.reshape(B * Ho * Wo, k * k * C)   # col index = (i*k + j)*C + c
    return cols, Ho, Wo


def conv2d_relu(x_nhwc, w_flat_bf16, b, k, s):
    """w_flat_bf16: (k*k*Cin, Cout) in (i, j, cin) row order (matches cols)."""
    B = x_nhwc.shape[0]
    pad = k // 2
    if k == s:
        cols, Ho, Wo = _space_to_depth_cols(x_nhwc, k, s, pad)
    else:
        cols, Ho, Wo = _im2col(x_nhwc, k, s, pad)
    cols = cols.astype(jnp.bfloat16)
    Cout = w_flat_bf16.shape[-1]
    y = pallas_linear(cols, w_flat_bf16, b, relu=True, out_dtype=jnp.bfloat16)
    return y.reshape(B, Ho, Wo, Cout)


# ----------------------------------------------------------------------------
# Deterministic parameter init (mirrors ActorCritic.init_weight: orthogonal
# weights with gain sqrt(2) for convs/neck, 0.01 actor head, 1.0 critic head,
# all biases zero).  bf16 copies of all matmul weights are built once here.
# ----------------------------------------------------------------------------
def _backbone_out_hw(h, w):
    for (_, k, s) in _CONV_CFG:
        h = (h + 2 * (k // 2) - k) // s + 1
        w = (w + 2 * (k // 2) - k) // s + 1
    return h, w


def init_params(key, obs_shape, action_shape):
    C, H, W = obs_shape
    gain = math.sqrt(2.0)
    ortho = jax.nn.initializers.orthogonal
    keys = jax.random.split(key, len(_CONV_CFG) + 3)

    params = {"convs": [], "convs_wflat_bf16": []}
    cin = C
    for idx, (cout, k, s) in enumerate(_CONV_CFG):
        w = ortho(gain)(keys[idx], (k, k, cin, cout), jnp.float32)
        b = jnp.zeros((cout,), jnp.float32)
        params["convs"].append((w, b))
        params["convs_wflat_bf16"].append(w.reshape(-1, cout).astype(jnp.bfloat16))
        cin = cout

    Hf, Wf = _backbone_out_hw(H, W)
    Cf = _CONV_CFG[-1][0]
    in_features = Cf * Hf * Wf

    # Neck weight rows in PyTorch NCHW-flatten order (kept for the reference),
    # plus a one-time row permutation so the Pallas path flattens NHWC directly
    # (removes the per-forward feature-map transpose).
    neck_w = ortho(gain)(keys[-3], (in_features, 512), jnp.float32)
    nchw_idx = np.arange(in_features).reshape(Cf, Hf, Wf)
    perm = nchw_idx.transpose(1, 2, 0).reshape(-1)      # NHWC pos -> NCHW row idx
    params["neck_w"] = neck_w
    params["neck_w_nhwc_bf16"] = neck_w[perm].astype(jnp.bfloat16)
    params["neck_b"] = jnp.zeros((512,), jnp.float32)

    actor_w = ortho(0.01)(keys[-2], (512, action_shape), jnp.float32)
    critic_w = ortho(1.0)(keys[-1], (512, 1), jnp.float32)
    params["actor_w"] = actor_w
    params["actor_b"] = jnp.zeros((action_shape,), jnp.float32)
    params["critic_w"] = critic_w
    params["critic_b"] = jnp.zeros((1,), jnp.float32)

    # Concatenated heads [critic | actor], zero-padded to a multiple of 128
    # lanes for a lane-dense store in the fused neck+heads kernel.
    n_heads = 1 + action_shape
    n_pad = (-n_heads) % 128
    head_w = jnp.concatenate([critic_w, actor_w], axis=1)
    head_b = jnp.concatenate([params["critic_b"], params["actor_b"]], axis=0)
    params["head_w_pad_bf16"] = jnp.pad(head_w, ((0, 0), (0, n_pad))).astype(jnp.bfloat16)
    params["head_b_pad"] = jnp.pad(head_b, ((0, n_pad),))
    return params


# ----------------------------------------------------------------------------
# Forward pass (training mode, feature_sharing=True).
# ----------------------------------------------------------------------------
def actor_critic_forward(params, x_nchw):
    bs = x_nchw.shape[0]
    x = jnp.transpose(x_nchw, (0, 2, 3, 1)).astype(jnp.bfloat16)   # NCHW -> NHWC once
    for (_w, b), w_flat, (_, k, s) in zip(params["convs"],
                                          params["convs_wflat_bf16"], _CONV_CFG):
        x = conv2d_relu(x, w_flat, b, k, s)
    feat = x.reshape(bs, -1)                          # NHWC flatten (weights pre-permuted)
    out = pallas_neck_heads(feat, params["neck_w_nhwc_bf16"], params["neck_b"],
                            params["head_w_pad_bf16"], params["head_b_pad"])
    n_actions = params["actor_b"].shape[0]
    value = out[:, 0:1]
    logits = out[:, 1:1 + n_actions]
    return value, logits


# ----------------------------------------------------------------------------
# Pure-JAX f32 reference (PyTorch-style NCHW flatten path) for a sanity check.
# ----------------------------------------------------------------------------
def reference_forward(params, x_nchw):
    bs = x_nchw.shape[0]
    x = jnp.transpose(x_nchw, (0, 2, 3, 1))
    for (w, b), (_, k, s) in zip(params["convs"], _CONV_CFG):
        x = jax.lax.conv_general_dilated(
            x, w, window_strides=(s, s), padding=[(k // 2, k // 2)] * 2,
            dimension_numbers=("NHWC", "HWIO", "NHWC"),
            precision=jax.lax.Precision.HIGHEST)
        x = jax.nn.relu(x + b)
    feat = jnp.transpose(x, (0, 3, 1, 2)).reshape(bs, -1)   # PyTorch NCHW flatten
    hi = jax.lax.Precision.HIGHEST
    af = jax.nn.relu(jnp.dot(feat, params["neck_w"], precision=hi) + params["neck_b"])
    value = jnp.dot(af, params["critic_w"], precision=hi) + params["critic_b"]
    logits = jnp.dot(af, params["actor_w"], precision=hi) + params["actor_b"]
    return value, logits


if __name__ == "__main__":
    obs_shape = (4, 16, 16)   # (C, H, W) -> backbone output 128 x 1 x 1 = 128 feats
    action_shape = 6
    batch = 2

    root = jax.random.PRNGKey(0)
    k_param, k_data = jax.random.split(root)
    params = init_params(k_param, obs_shape, action_shape)
    x = jax.random.normal(k_data, (batch,) + obs_shape, jnp.float32)

    value, logits = jax.jit(actor_critic_forward)(params, x)
    value = jax.block_until_ready(value)
    logits = jax.block_until_ready(logits)

    assert value.shape == (batch, 1), value.shape
    assert logits.shape == (batch, action_shape), logits.shape

    ref_value, ref_logits = reference_forward(params, x)
    assert jnp.allclose(value, ref_value, rtol=2e-2, atol=2e-2)
    assert jnp.allclose(logits, ref_logits, rtol=2e-2, atol=2e-2)

    print("KERNEL_OK")
</pallas_src>

<mosaic_0001>
module attributes {stable_mosaic.version = 11 : i64} {
  func.func @_linear_kernel(%arg0: i32, %arg1: memref<32x64xbf16, #tpu.memory_space<vmem>>, %arg2: memref<64x32xbf16, #tpu.memory_space<vmem>>, %arg3: memref<1x32xf32, #tpu.memory_space<vmem>>, %arg4: memref<32x32xbf16, #tpu.memory_space<vmem>>) attributes {dimension_semantics = [#tpu.dimension_semantics<parallel>], iteration_bounds = array<i64: 2>, scalar_prefetch = 0 : i64, scratch_operands = 0 : i64, tpu.core_type = #tpu.core_type<tc>, window_params = [{transform_indices = @transform_0, window_bounds = array<i64: 32, 64>}, {pipeline_mode = #tpu.pipeline_mode<synchronous>, transform_indices = @transform_1, window_bounds = array<i64: 64, 32>}, {pipeline_mode = #tpu.pipeline_mode<synchronous>, transform_indices = @transform_2, window_bounds = array<i64: 1, 32>}, {transform_indices = @transform_3, window_bounds = array<i64: 32, 32>}]} {
    %c0 = arith.constant 0 : index
    %c0_0 = arith.constant 0 : index
    %0 = vector.load %arg1[%c0, %c0_0] : memref<32x64xbf16, #tpu.memory_space<vmem>>, vector<32x64xbf16>
    %c0_1 = arith.constant 0 : index
    %c0_2 = arith.constant 0 : index
    %1 = vector.load %arg2[%c0_1, %c0_2] : memref<64x32xbf16, #tpu.memory_space<vmem>>, vector<64x32xbf16>
    %cst = arith.constant dense<0.000000e+00> : vector<32x32xf32>
    %2 = tpu.matmul %0, %1, %cst {dimension_numbers = #tpu.dot_dimension_numbers<[1], [0], [0], [1], [0, 0, 1, 1], [], []>} : vector<32x64xbf16>, vector<64x32xbf16>, vector<32x32xf32> -> vector<32x32xf32>
    %c0_3 = arith.constant 0 : index
    %c0_4 = arith.constant 0 : index
    %3 = vector.load %arg3[%c0_3, %c0_4] : memref<1x32xf32, #tpu.memory_space<vmem>>, vector<1x32xf32>
    %4 = vector.broadcast %3 : vector<1x32xf32> to vector<32x32xf32>
    %5 = arith.addf %2, %4 : vector<32x32xf32>
    %cst_5 = arith.constant 0.000000e+00 : f32
    %6 = vector.broadcast %cst_5 : f32 to vector<32x32xf32>
    %7 = arith.maximumf %5, %6 : vector<32x32xf32>
    %8 = arith.truncf %7 : vector<32x32xf32> to vector<32x32xbf16>
    %c0_6 = arith.constant 0 : index
    %c0_7 = arith.constant 0 : index
    %9 = vector.load %arg4[%c0_6, %c0_7] : memref<32x32xbf16, #tpu.memory_space<vmem>>, vector<32x32xbf16>
    tpu.vector_store %arg4[%c0_6, %c0_7], %8 {strides = array<i32>} : memref<32x32xbf16, #tpu.memory_space<vmem>>, vector<32x32xbf16>,
    return
  }
  func.func @transform_0(%arg0: i32) -> (i32, i32) {
    %c0_i32 = arith.constant 0 : i32
    %c0_i32_0 = arith.constant 0 : i32
    return %arg0, %c0_i32 : i32, i32
  }
  func.func @transform_1(%arg0: i32) -> (i32, i32) {
    %c0_i32 = arith.constant 0 : i32
    %c0_i32_0 = arith.constant 0 : i32
    %c0_i32_1 = arith.constant 0 : i32
    return %c0_i32, %c0_i32_0 : i32, i32
  }
  func.func @transform_2(%arg0: i32) -> (i32, i32) {
    %c0_i32 = arith.constant 0 : i32
    %c0_i32_0 = arith.constant 0 : i32
    %c0_i32_1 = arith.constant 0 : i32
    return %c0_i32, %c0_i32_0 : i32, i32
  }
  func.func @transform_3(%arg0: i32) -> (i32, i32) {
    %c0_i32 = arith.constant 0 : i32
    %c0_i32_0 = arith.constant 0 : i32
    return %arg0, %c0_i32 : i32, i32
  }
}

module attributes {stable_mosaic.version = 11 : i64} {
  func.func @_linear_kernel(%arg0: i32, %arg1: memref<18x288xbf16, #tpu.memory_space<vmem>>, %arg2: memref<288x32xbf16, #tpu.memory_space<vmem>>, %arg3: memref<1x32xf32, #tpu.memory_space<vmem>>, %arg4: memref<18x32xbf16, #tpu.memory_space<vmem>>) attributes {dimension_semantics = [#tpu.dimension_semantics<parallel>], iteration_bounds = array<i64: 1>, scalar_prefetch = 0 : i64, scratch_operands = 0 : i64, tpu.core_type = #tpu.core_type<tc>, window_params = [{transform_indices = @transform_0, window_bounds = array<i64: 18, 288>}, {pipeline_mode = #tpu.pipeline_mode<synchronous>, transform_indices = @transform_1, window_bounds = array<i64: 288, 32>}, {pipeline_mode = #tpu.pipeline_mode<synchronous>, transform_indices = @transform_2, window_bounds = array<i64: 1, 32>}, {transform_indices = @transform_3, window_bounds = array<i64: 18, 32>}]} {
    %c0 = arith.constant 0 : index
    %c0_0 = arith.constant 0 : index
    %0 = vector.load %arg1[%c0, %c0_0] : memref<18x288xbf16, #tpu.memory_space<vmem>>, vector<18x288xbf16>
    %c0_1 = arith.constant 0 : index
    %c0_2 = arith.constant 0 : index
    %1 = vector.load %arg2[%c0_1, %c0_2] : memref<288x32xbf16, #tpu.memory_space<vmem>>, vector<288x32xbf16>
    %cst = arith.constant dense<0.000000e+00> : vector<18x32xf32>
    %2 = tpu.matmul %0, %1, %cst {dimension_numbers = #tpu.dot_dimension_numbers<[1], [0], [0], [1], [0, 0, 1, 1], [], []>} : vector<18x288xbf16>, vector<288x32xbf16>, vector<18x32xf32> -> vector<18x32xf32>
    %c0_3 = arith.constant 0 : index
    %c0_4 = arith.constant 0 : index
    %3 = vector.load %arg3[%c0_3, %c0_4] : memref<1x32xf32, #tpu.memory_space<vmem>>, vector<1x32xf32>
    %4 = vector.broadcast %3 : vector<1x32xf32> to vector<18x32xf32>
    %5 = arith.addf %2, %4 : vector<18x32xf32>
    %cst_5 = arith.constant 0.000000e+00 : f32
    %6 = vector.broadcast %cst_5 : f32 to vector<18x32xf32>
    %7 = arith.maximumf %5, %6 : vector<18x32xf32>
    %8 = arith.truncf %7 : vector<18x32xf32> to vector<18x32xbf16>
    %c0_6 = arith.constant 0 : index
    %c0_7 = arith.constant 0 : index
    %9 = vector.load %arg4[%c0_6, %c0_7] : memref<18x32xbf16, #tpu.memory_space<vmem>>, vector<18x32xbf16>
    tpu.vector_store %arg4[%c0_6, %c0_7], %8 {strides = array<i32>} : memref<18x32xbf16, #tpu.memory_space<vmem>>, vector<18x32xbf16>,
    return
  }
  func.func @transform_0(%arg0: i32) -> (i32, i32) {
    %c0_i32 = arith.constant 0 : i32
    %c0_i32_0 = arith.constant 0 : i32
    return %arg0, %c0_i32 : i32, i32
  }
  func.func @transform_1(%arg0: i32) -> (i32, i32) {
    %c0_i32 = arith.constant 0 : i32
    %c0_i32_0 = arith.constant 0 : i32
    %c0_i32_1 = arith.constant 0 : i32
    return %c0_i32, %c0_i32_0 : i32, i32
  }
  func.func @transform_2(%arg0: i32) -> (i32, i32) {
    %c0_i32 = arith.constant 0 : i32
    %c0_i32_0 = arith.constant 0 : i32
    %c0_i32_1 = arith.constant 0 : i32
    return %c0_i32, %c0_i32_0 : i32, i32
  }
  func.func @transform_3(%arg0: i32) -> (i32, i32) {
    %c0_i32 = arith.constant 0 : i32
    %c0_i32_0 = arith.constant 0 : i32
    return %arg0, %c0_i32 : i32, i32
  }
}

module attributes {stable_mosaic.version = 11 : i64} {
  func.func @_linear_kernel(%arg0: i32, %arg1: memref<8x288xbf16, #tpu.memory_space<vmem>>, %arg2: memref<288x64xbf16, #tpu.memory_space<vmem>>, %arg3: memref<1x64xf32, #tpu.memory_space<vmem>>, %arg4: memref<8x64xbf16, #tpu.memory_space<vmem>>) attributes {dimension_semantics = [#tpu.dimension_semantics<parallel>], iteration_bounds = array<i64: 1>, scalar_prefetch = 0 : i64, scratch_operands = 0 : i64, tpu.core_type = #tpu.core_type<tc>, window_params = [{transform_indices = @transform_0, window_bounds = array<i64: 8, 288>}, {pipeline_mode = #tpu.pipeline_mode<synchronous>, transform_indices = @transform_1, window_bounds = array<i64: 288, 64>}, {pipeline_mode = #tpu.pipeline_mode<synchronous>, transform_indices = @transform_2, window_bounds = array<i64: 1, 64>}, {transform_indices = @transform_3, window_bounds = array<i64: 8, 64>}]} {
    %c0 = arith.constant 0 : index
    %c0_0 = arith.constant 0 : index
    %0 = vector.load %arg1[%c0, %c0_0] : memref<8x288xbf16, #tpu.memory_space<vmem>>, vector<8x288xbf16>
    %c0_1 = arith.constant 0 : index
    %c0_2 = arith.constant 0 : index
    %1 = vector.load %arg2[%c0_1, %c0_2] : memref<288x64xbf16, #tpu.memory_space<vmem>>, vector<288x64xbf16>
    %cst = arith.constant dense<0.000000e+00> : vector<8x64xf32>
    %2 = tpu.matmul %0, %1, %cst {dimension_numbers = #tpu.dot_dimension_numbers<[1], [0], [0], [1], [0, 0, 1, 1], [], []>} : vector<8x288xbf16>, vector<288x64xbf16>, vector<8x64xf32> -> vector<8x64xf32>
    %c0_3 = arith.constant 0 : index
    %c0_4 = arith.constant 0 : index
    %3 = vector.load %arg3[%c0_3, %c0_4] : memref<1x64xf32, #tpu.memory_space<vmem>>, vector<1x64xf32>
    %4 = vector.broadcast %3 : vector<1x64xf32> to vector<8x64xf32>
    %5 = arith.addf %2, %4 : vector<8x64xf32>
    %cst_5 = arith.constant 0.000000e+00 : f32
    %6 = vector.broadcast %cst_5 : f32 to vector<8x64xf32>
    %7 = arith.maximumf %5, %6 : vector<8x64xf32>
    %8 = arith.truncf %7 : vector<8x64xf32> to vector<8x64xbf16>
    %c0_6 = arith.constant 0 : index
    %c0_7 = arith.constant 0 : index
    %9 = vector.load %arg4[%c0_6, %c0_7] : memref<8x64xbf16, #tpu.memory_space<vmem>>, vector<8x64xbf16>
    tpu.vector_store %arg4[%c0_6, %c0_7], %8 {strides = array<i32>} : memref<8x64xbf16, #tpu.memory_space<vmem>>, vector<8x64xbf16>,
    return
  }
  func.func @transform_0(%arg0: i32) -> (i32, i32) {
    %c0_i32 = arith.constant 0 : i32
    %c0_i32_0 = arith.constant 0 : i32
    return %arg0, %c0_i32 : i32, i32
  }
  func.func @transform_1(%arg0: i32) -> (i32, i32) {
    %c0_i32 = arith.constant 0 : i32
    %c0_i32_0 = arith.constant 0 : i32
    %c0_i32_1 = arith.constant 0 : i32
    return %c0_i32, %c0_i32_0 : i32, i32
  }
  func.func @transform_2(%arg0: i32) -> (i32, i32) {
    %c0_i32 = arith.constant 0 : i32
    %c0_i32_0 = arith.constant 0 : i32
    %c0_i32_1 = arith.constant 0 : i32
    return %c0_i32, %c0_i32_0 : i32, i32
  }
  func.func @transform_3(%arg0: i32) -> (i32, i32) {
    %c0_i32 = arith.constant 0 : i32
    %c0_i32_0 = arith.constant 0 : i32
    return %arg0, %c0_i32 : i32, i32
  }
}

module attributes {stable_mosaic.version = 11 : i64} {
  func.func @_linear_kernel(%arg0: i32, %arg1: memref<2x576xbf16, #tpu.memory_space<vmem>>, %arg2: memref<576x64xbf16, #tpu.memory_space<vmem>>, %arg3: memref<1x64xf32, #tpu.memory_space<vmem>>, %arg4: memref<2x64xbf16, #tpu.memory_space<vmem>>) attributes {dimension_semantics = [#tpu.dimension_semantics<parallel>], iteration_bounds = array<i64: 1>, scalar_prefetch = 0 : i64, scratch_operands = 0 : i64, tpu.core_type = #tpu.core_type<tc>, window_params = [{transform_indices = @transform_0, window_bounds = array<i64: 2, 576>}, {pipeline_mode = #tpu.pipeline_mode<synchronous>, transform_indices = @transform_1, window_bounds = array<i64: 576, 64>}, {pipeline_mode = #tpu.pipeline_mode<synchronous>, transform_indices = @transform_2, window_bounds = array<i64: 1, 64>}, {transform_indices = @transform_3, window_bounds = array<i64: 2, 64>}]} {
    %c0 = arith.constant 0 : index
    %c0_0 = arith.constant 0 : index
    %0 = vector.load %arg1[%c0, %c0_0] : memref<2x576xbf16, #tpu.memory_space<vmem>>, vector<2x576xbf16>
    %c0_1 = arith.constant 0 : index
    %c0_2 = arith.constant 0 : index
    %1 = vector.load %arg2[%c0_1, %c0_2] : memref<576x64xbf16, #tpu.memory_space<vmem>>, vector<576x64xbf16>
    %cst = arith.constant dense<0.000000e+00> : vector<2x64xf32>
    %2 = tpu.matmul %0, %1, %cst {dimension_numbers = #tpu.dot_dimension_numbers<[1], [0], [0], [1], [0, 0, 1, 1], [], []>} : vector<2x576xbf16>, vector<576x64xbf16>, vector<2x64xf32> -> vector<2x64xf32>
    %c0_3 = arith.constant 0 : index
    %c0_4 = arith.constant 0 : index
    %3 = vector.load %arg3[%c0_3, %c0_4] : memref<1x64xf32, #tpu.memory_space<vmem>>, vector<1x64xf32>
    %4 = vector.broadcast %3 : vector<1x64xf32> to vector<2x64xf32>
    %5 = arith.addf %2, %4 : vector<2x64xf32>
    %cst_5 = arith.constant 0.000000e+00 : f32
    %6 = vector.broadcast %cst_5 : f32 to vector<2x64xf32>
    %7 = arith.maximumf %5, %6 : vector<2x64xf32>
    %8 = arith.truncf %7 : vector<2x64xf32> to vector<2x64xbf16>
    %c0_6 = arith.constant 0 : index
    %c0_7 = arith.constant 0 : index
    %9 = vector.load %arg4[%c0_6, %c0_7] : memref<2x64xbf16, #tpu.memory_space<vmem>>, vector<2x64xbf16>
    tpu.vector_store %arg4[%c0_6, %c0_7], %8 {strides = array<i32>} : memref<2x64xbf16, #tpu.memory_space<vmem>>, vector<2x64xbf16>,
    return
  }
  func.func @transform_0(%arg0: i32) -> (i32, i32) {
    %c0_i32 = arith.constant 0 : i32
    %c0_i32_0 = arith.constant 0 : i32
    return %arg0, %c0_i32 : i32, i32
  }
  func.func @transform_1(%arg0: i32) -> (i32, i32) {
    %c0_i32 = arith.constant 0 : i32
    %c0_i32_0 = arith.constant 0 : i32
    %c0_i32_1 = arith.constant 0 : i32
    return %c0_i32, %c0_i32_0 : i32, i32
  }
  func.func @transform_2(%arg0: i32) -> (i32, i32) {
    %c0_i32 = arith.constant 0 : i32
    %c0_i32_0 = arith.constant 0 : i32
    %c0_i32_1 = arith.constant 0 : i32
    return %c0_i32, %c0_i32_0 : i32, i32
  }
  func.func @transform_3(%arg0: i32) -> (i32, i32) {
    %c0_i32 = arith.constant 0 : i32
    %c0_i32_0 = arith.constant 0 : i32
    return %arg0, %c0_i32 : i32, i32
  }
}

module attributes {stable_mosaic.version = 11 : i64} {
  func.func @_linear_kernel(%arg0: i32, %arg1: memref<2x576xbf16, #tpu.memory_space<vmem>>, %arg2: memref<576x128xbf16, #tpu.memory_space<vmem>>, %arg3: memref<1x128xf32, #tpu.memory_space<vmem>>, %arg4: memref<2x128xbf16, #tpu.memory_space<vmem>>) attributes {dimension_semantics = [#tpu.dimension_semantics<parallel>], iteration_bounds = array<i64: 1>, scalar_prefetch = 0 : i64, scratch_operands = 0 : i64, tpu.core_type = #tpu.core_type<tc>, window_params = [{transform_indices = @transform_0, window_bounds = array<i64: 2, 576>}, {pipeline_mode = #tpu.pipeline_mode<synchronous>, transform_indices = @transform_1, window_bounds = array<i64: 576, 128>}, {pipeline_mode = #tpu.pipeline_mode<synchronous>, transform_indices = @transform_2, window_bounds = array<i64: 1, 128>}, {transform_indices = @transform_3, window_bounds = array<i64: 2, 128>}]} {
    %c0 = arith.constant 0 : index
    %c0_0 = arith.constant 0 : index
    %0 = vector.load %arg1[%c0, %c0_0] : memref<2x576xbf16, #tpu.memory_space<vmem>>, vector<2x576xbf16>
    %c0_1 = arith.constant 0 : index
    %c0_2 = arith.constant 0 : index
    %1 = vector.load %arg2[%c0_1, %c0_2] : memref<576x128xbf16, #tpu.memory_space<vmem>>, vector<576x128xbf16>
    %cst = arith.constant dense<0.000000e+00> : vector<2x128xf32>
    %2 = tpu.matmul %0, %1, %cst {dimension_numbers = #tpu.dot_dimension_numbers<[1], [0], [0], [1], [0, 0, 1, 1], [], []>} : vector<2x576xbf16>, vector<576x128xbf16>, vector<2x128xf32> -> vector<2x128xf32>
    %c0_3 = arith.constant 0 : index
    %c0_4 = arith.constant 0 : index
    %3 = vector.load %arg3[%c0_3, %c0_4] : memref<1x128xf32, #tpu.memory_space<vmem>>, vector<1x128xf32>
    %4 = vector.broadcast %3 : vector<1x128xf32> to vector<2x128xf32>
    %5 = arith.addf %2, %4 : vector<2x128xf32>
    %cst_5 = arith.constant 0.000000e+00 : f32
    %6 = vector.broadcast %cst_5 : f32 to vector<2x128xf32>
    %7 = arith.maximumf %5, %6 : vector<2x128xf32>
    %8 = arith.truncf %7 : vector<2x128xf32> to vector<2x128xbf16>
    %c0_6 = arith.constant 0 : index
    %c0_7 = arith.constant 0 : index
    %9 = vector.load %arg4[%c0_6, %c0_7] : memref<2x128xbf16, #tpu.memory_space<vmem>>, vector<2x128xbf16>
    tpu.vector_store %arg4[%c0_6, %c0_7], %8 {strides = array<i32>} : memref<2x128xbf16, #tpu.memory_space<vmem>>, vector<2x128xbf16>,
    return
  }
  func.func @transform_0(%arg0: i32) -> (i32, i32) {
    %c0_i32 = arith.constant 0 : i32
    %c0_i32_0 = arith.constant 0 : i32
    return %arg0, %c0_i32 : i32, i32
  }
  func.func @transform_1(%arg0: i32) -> (i32, i32) {
    %c0_i32 = arith.constant 0 : i32
    %c0_i32_0 = arith.constant 0 : i32
    %c0_i32_1 = arith.constant 0 : i32
    return %c0_i32, %c0_i32_0 : i32, i32
  }
  func.func @transform_2(%arg0: i32) -> (i32, i32) {
    %c0_i32 = arith.constant 0 : i32
    %c0_i32_0 = arith.constant 0 : i32
    %c0_i32_1 = arith.constant 0 : i32
    return %c0_i32, %c0_i32_0 : i32, i32
  }
  func.func @transform_3(%arg0: i32) -> (i32, i32) {
    %c0_i32 = arith.constant 0 : i32
    %c0_i32_0 = arith.constant 0 : i32
    return %arg0, %c0_i32 : i32, i32
  }
}

module attributes {stable_mosaic.version = 11 : i64} {
  func.func @_neck_heads_kernel(%arg0: i32, %arg1: memref<2x128xbf16, #tpu.memory_space<vmem>>, %arg2: memref<128x512xbf16, #tpu.memory_space<vmem>>, %arg3: memref<1x512xf32, #tpu.memory_space<vmem>>, %arg4: memref<512x128xbf16, #tpu.memory_space<vmem>>, %arg5: memref<1x128xf32, #tpu.memory_space<vmem>>, %arg6: memref<2x128xf32, #tpu.memory_space<vmem>>) attributes {dimension_semantics = [#tpu.dimension_semantics<parallel>], iteration_bounds = array<i64: 1>, scalar_prefetch = 0 : i64, scratch_operands = 0 : i64, tpu.core_type = #tpu.core_type<tc>, window_params = [{transform_indices = @transform_0, window_bounds = array<i64: 2, 128>}, {pipeline_mode = #tpu.pipeline_mode<synchronous>, transform_indices = @transform_1, window_bounds = array<i64: 128, 512>}, {pipeline_mode = #tpu.pipeline_mode<synchronous>, transform_indices = @transform_2, window_bounds = array<i64: 1, 512>}, {pipeline_mode = #tpu.pipeline_mode<synchronous>, transform_indices = @transform_3, window_bounds = array<i64: 512, 128>}, {pipeline_mode = #tpu.pipeline_mode<synchronous>, transform_indices = @transform_4, window_bounds = array<i64: 1, 128>}, {transform_indices = @transform_5, window_bounds = array<i64: 2, 128>}]} {
    %c0 = arith.constant 0 : index
    %c0_0 = arith.constant 0 : index
    %0 = vector.load %arg1[%c0, %c0_0] : memref<2x128xbf16, #tpu.memory_space<vmem>>, vector<2x128xbf16>
    %c0_1 = arith.constant 0 : index
    %c0_2 = arith.constant 0 : index
    %1 = vector.load %arg2[%c0_1, %c0_2] : memref<128x512xbf16, #tpu.memory_space<vmem>>, vector<128x512xbf16>
    %cst = arith.constant dense<0.000000e+00> : vector<2x512xf32>
    %2 = tpu.matmul %0, %1, %cst {dimension_numbers = #tpu.dot_dimension_numbers<[1], [0], [0], [1], [0, 0, 1, 1], [], []>} : vector<2x128xbf16>, vector<128x512xbf16>, vector<2x512xf32> -> vector<2x512xf32>
    %c0_3 = arith.constant 0 : index
    %c0_4 = arith.constant 0 : index
    %3 = vector.load %arg3[%c0_3, %c0_4] : memref<1x512xf32, #tpu.memory_space<vmem>>, vector<1x512xf32>
    %4 = vector.broadcast %3 : vector<1x512xf32> to vector<2x512xf32>
    %5 = arith.addf %2, %4 : vector<2x512xf32>
    %cst_5 = arith.constant 0.000000e+00 : f32
    %6 = vector.broadcast %cst_5 : f32 to vector<2x512xf32>
    %7 = arith.maximumf %5, %6 : vector<2x512xf32>
    %8 = arith.truncf %7 : vector<2x512xf32> to vector<2x512xbf16>
    %c0_6 = arith.constant 0 : index
    %c0_7 = arith.constant 0 : index
    %9 = vector.load %arg4[%c0_6, %c0_7] : memref<512x128xbf16, #tpu.memory_space<vmem>>, vector<512x128xbf16>
    %cst_8 = arith.constant dense<0.000000e+00> : vector<2x128xf32>
    %10 = tpu.matmul %8, %9, %cst_8 {dimension_numbers = #tpu.dot_dimension_numbers<[1], [0], [0], [1], [0, 0, 1, 1], [], []>} : vector<2x512xbf16>, vector<512x128xbf16>, vector<2x128xf32> -> vector<2x128xf32>
    %c0_9 = arith.constant 0 : index
    %c0_10 = arith.constant 0 : index
    %11 = vector.load %arg5[%c0_9, %c0_10] : memref<1x128xf32, #tpu.memory_space<vmem>>, vector<1x128xf32>
    %12 = vector.broadcast %11 : vector<1x128xf32> to vector<2x128xf32>
    %13 = arith.addf %10, %12 : vector<2x128xf32>
    %c0_11 = arith.constant 0 : index
    %c0_12 = arith.constant 0 : index
    %14 = vector.load %arg6[%c0_11, %c0_12] : memref<2x128xf32, #tpu.memory_space<vmem>>, vector<2x128xf32>
    tpu.vector_store %arg6[%c0_11, %c0_12], %13 {strides = array<i32>} : memref<2x128xf32, #tpu.memory_space<vmem>>, vector<2x128xf32>,
    return
  }
  func.func @transform_0(%arg0: i32) -> (i32, i32) {
    %c0_i32 = arith.constant 0 : i32
    %c0_i32_0 = arith.constant 0 : i32
    return %arg0, %c0_i32 : i32, i32
  }
  func.func @transform_1(%arg0: i32) -> (i32, i32) {
    %c0_i32 = arith.constant 0 : i32
    %c0_i32_0 = arith.constant 0 : i32
    %c0_i32_1 = arith.constant 0 : i32
    return %c0_i32, %c0_i32_0 : i32, i32
  }
  func.func @transform_2(%arg0: i32) -> (i32, i32) {
    %c0_i32 = arith.constant 0 : i32
    %c0_i32_0 = arith.constant 0 : i32
    %c0_i32_1 = arith.constant 0 : i32
    return %c0_i32, %c0_i32_0 : i32, i32
  }
  func.func @transform_3(%arg0: i32) -> (i32, i32) {
    %c0_i32 = arith.constant 0 : i32
    %c0_i32_0 = arith.constant 0 : i32
    %c0_i32_1 = arith.constant 0 : i32
    return %c0_i32, %c0_i32_0 : i32, i32
  }
  func.func @transform_4(%arg0: i32) -> (i32, i32) {
    %c0_i32 = arith.constant 0 : i32
    %c0_i32_0 = arith.constant 0 : i32
    %c0_i32_1 = arith.constant 0 : i32
    return %c0_i32, %c0_i32_0 : i32, i32
  }
  func.func @transform_5(%arg0: i32) -> (i32, i32) {
    %c0_i32 = arith.constant 0 : i32
    %c0_i32_0 = arith.constant 0 : i32
    return %arg0, %c0_i32 : i32, i32
  }
}

</mosaic_0001>

<llo_original>
// kernel: actor_critic_forward.7
$region0: #{actor_critic_forward.7}
  #allocation0 [shape = 'u32[]', space=smem, size = 0x4, offset = 0x4, fixed_abs, tag = 'smem constant byte address 0x4 - core index']
  #allocation1 [shape = 'u32[144,128]{1,0:T(1,128)}', space=vmem, size = 0x12000, scoped, tag = 'internal scratch']
  %s0 = inlined_call_operand.vmem [shape: bf16[50,64], index: 0, kind: input, shape index: {}]
  %s1 = inlined_call_operand.vmem [shape: bf16[64,32], index: 1, kind: input, shape index: {}]
  %s2 = inlined_call_operand.vmem [shape: f32[1,32], index: 2, kind: input, shape index: {}]
  %s3 = inlined_call_operand.vmem [shape: bf16[50,32], index: 3, kind: output, shape index: {}]
  %s4 = sld [smem:[#allocation0]]
  $region89: #{actor_critic_forward.7} parent=0
    _
  %s6 = ssub.s32 1, %s4
  %s7 = scalar_select 0, %s6, %s4
  $region1: #{actor_critic_forward.7} parent=0
    #allocation2 [shape = 'u8[16384]{0}', space=vmem, size = 0x4000, scoped, tag = 'output window, operand 0']
    loop: start=0, step=1, limit=4
    $region2: #{actor_critic_forward.7} parent=1 // loop_pre_header
      _
    $region3: #{actor_critic_forward.7} parent=1 // loop_header
      %s9 = sphi 0, %s13
      %p10 = scmp.ge.s32.totalorder %s9, 4
      %s19 = sphi 0, %s21
      %s22 = sphi 0, %s19
      %s23 = sphi 0, %s22
      %s39 = sphi 0, %s23
      %s43 = sphi 0, %s43
      %s45 = sphi 0, %s43
      %s46 = sphi 0, %s45
      %s60 = sphi 0, %s46
      %s64 = sphi 0, %s64
      %s66 = sphi 0, %s64
      %s67 = sphi 0, %s66
      %s81 = sphi 0, %s67
      %s87 = sphi 0, %s89
      %s90 = sphi 0, %s87
      %s91 = sphi 0, %s90
      %s107 = sphi 0, %s91
    $region4: #{actor_critic_forward.7} parent=1 // loop_header_branch
      %12 = sbr.rel (%p10) target = $region8
    $region5: #{actor_critic_forward.7} parent=1 // loop_body
      %s14 = ssub.s32 %s9, 1
      %s15 = ssub.s32 %s9, 2
      %s16 = sadd.s32 %s9, 1
      %s17 = ssub.s32 %s9, %s16
      %p18 = scmp.eq.s32.totalorder %s17, 0
      %s20 = sadd.s32 %s19, 1
      %s21 = scalar_select %p18, %s19, %s20
      %p24 = pneg %p18
      %p25 = scmp.eq.s32.totalorder %s9, 1
      %p26 = por %p24, %p25
      %p27 = scmp.ne.s32.totalorder %s19, %s22
      %p28 = scmp.eq.s32.totalorder %s9, 0
      %p29 = por %p27, %p28
      %p30 = scmp.ne.s32.totalorder %s19, %s22
      %p31 = scmp.eq.s32.totalorder %s14, 1
      %p32 = por %p30, %p31
      %p33 = scmp.ne.s32.totalorder %s22, %s23
      %p34 = scmp.eq.s32.totalorder %s14, 0
      %p35 = por %p33, %p34
      %p36 = scmp.ne.s32.totalorder %s22, %s23
      %p37 = scmp.eq.s32.totalorder %s15, 1
      %p38 = por %p36, %p37
      %p40 = scmp.ne.s32.totalorder %s23, %s39
      %p41 = scmp.eq.s32.totalorder %s15, 0
      %p42 = por %p40, %p41
      %s44 = sadd.s32 %s43, 1
      %p47 = scmp.eq.s32.totalorder %s9, 1
      %p48 = scmp.ne.s32.totalorder %s43, %s45
      %p49 = scmp.eq.s32.totalorder %s9, 0
      %p50 = por %p48, %p49
      %p51 = scmp.ne.s32.totalorder %s43, %s45
      %p52 = scmp.eq.s32.totalorder %s14, 1
      %p53 = por %p51, %p52
      %p54 = scmp.ne.s32.totalorder %s45, %s46
      %p55 = scmp.eq.s32.totalorder %s14, 0
      %p56 = por %p54, %p55
      %p57 = scmp.ne.s32.totalorder %s45, %s46
      %p58 = scmp.eq.s32.totalorder %s15, 1
      %p59 = por %p57, %p58
      %p61 = scmp.ne.s32.totalorder %s46, %s60
      %p62 = scmp.eq.s32.totalorder %s15, 0
      %p63 = por %p61, %p62
      %s65 = sadd.s32 %s64, 1
      %p68 = scmp.eq.s32.totalorder %s9, 1
      %p69 = scmp.ne.s32.totalorder %s64, %s66
      %p70 = scmp.eq.s32.totalorder %s9, 0
      %p71 = por %p69, %p70
      %p72 = scmp.ne.s32.totalorder %s64, %s66
      %p73 = scmp.eq.s32.totalorder %s14, 1
      %p74 = por %p72, %p73
      %p75 = scmp.ne.s32.totalorder %s66, %s67
      %p76 = scmp.eq.s32.totalorder %s14, 0
      %p77 = por %p75, %p76
      %p78 = scmp.ne.s32.totalorder %s66, %s67
      %p79 = scmp.eq.s32.totalorder %s15, 1
      %p80 = por %p78, %p79
      %p82 = scmp.ne.s32.totalorder %s67, %s81
      %p83 = scmp.eq.s32.totalorder %s15, 0
      %p84 = por %p82, %p83
      %s85 = ssub.s32 %s9, %s16
      %p86 = scmp.eq.s32.totalorder %s85, 0
      %s88 = sadd.s32 %s87, 1
      %s89 = scalar_select %p86, %s87, %s88
      %p92 = pneg %p86
      %p93 = scmp.eq.s32.totalorder %s9, 1
      %p94 = por %p92, %p93
      %p95 = scmp.ne.s32.totalorder %s87, %s90
      %p96 = scmp.eq.s32.totalorder %s9, 0
      %p97 = por %p95, %p96
      %p98 = scmp.ne.s32.totalorder %s87, %s90
      %p99 = scmp.eq.s32.totalorder %s14, 1
      %p100 = por %p98, %p99
      %p101 = scmp.ne.s32.totalorder %s90, %s91
      %p102 = scmp.eq.s32.totalorder %s14, 0
      %p103 = por %p101, %p102
      %p104 = scmp.ne.s32.totalorder %s90, %s91
      %p105 = scmp.eq.s32.totalorder %s15, 1
      %p106 = por %p104, %p105
      %p108 = scmp.ne.s32.totalorder %s91, %s107
      %p109 = scmp.eq.s32.totalorder %s15, 0
      %p110 = por %p108, %p109
      %p111 = scmp.le.s32.totalorder 1, %s9
      %p112 = scmp.lt.s32.totalorder %s9, 3
      %p113 = pnand %p111, %p112
      %p114 = pneg %p113
      // Predicated region
      $region9: #{actor_critic_forward.7} parent=5 // pred_check
        _
      $region10: #{actor_critic_forward.7} parent=5 // pred_check_branch
        %116 = sbr.rel (%p113) target = $region12
      $region11: #{actor_critic_forward.7} parent=5 // pred_region
        %s117 = ssub.s32 %s9, 1
        // Predicated region
        $region13: #{actor_critic_forward.7} parent=11 // pred_check
          %p118 = pneg %p56
        $region14: #{actor_critic_forward.7} parent=11 // pred_check_branch
          %120 = sbr.rel (%p118) target = $region16
        $region15: #{actor_critic_forward.7} parent=11 // pred_region
          _
        $region16: #{actor_critic_forward.7} parent=11 // pred_fallthru
          _
        // Predicated region
        $region17: #{actor_critic_forward.7} parent=11 // pred_check
          %p121 = pneg %p77
        $region18: #{actor_critic_forward.7} parent=11 // pred_check_branch
          %123 = sbr.rel (%p121) target = $region20
        $region19: #{actor_critic_forward.7} parent=11 // pred_region
          _
        $region20: #{actor_critic_forward.7} parent=11 // pred_fallthru
          _
      $region12: #{actor_critic_forward.7} parent=5 // pred_fallthru
        _
      %p124 = scmp.lt.s32.totalorder %s9, 2
      // Predicated region
      $region21: #{actor_critic_forward.7} parent=5 // pred_check
        %p125 = pneg %p124
      $region22: #{actor_critic_forward.7} parent=5 // pred_check_branch
        %127 = sbr.rel (%p125) target = $region24
      $region23: #{actor_critic_forward.7} parent=5 // pred_region
        // Predicated region
        $region25: #{actor_critic_forward.7} parent=23 // pred_check
          %p128 = pneg %p29
        $region26: #{actor_critic_forward.7} parent=23 // pred_check_branch
          %130 = sbr.rel (%p128) target = $region28
        $region27: #{actor_critic_forward.7} parent=23 // pred_region
          %s131 = smul.u32 4, %s9
          %s132 = ssub.s32 7, %s131
          %p133 = scmp.lt.s32.totalorder %s132, 4
          %s134 = scalar_select %p133, %s132, 4
          %s135 = smul.u32 64, %s134
          %p136 = scmp.lt.s32.totalorder %s131, 6
          %s137 = scalar_select %p136, %s131, 6
          %s138 = smul.addr %s137, 4
          %s139 = scalar_lea.vmem %s0, %s138
          %s140 = smul.u32 4, %s9
          %s141 = ssub.s32 7, %s140
          %p142 = scmp.lt.s32.totalorder %s141, 4
          %s143 = scalar_select %p142, %s141, 4
          %s144 = smul.u32 64, %s143
        $region28: #{actor_critic_forward.7} parent=23 // pred_fallthru
          _
      $region24: #{actor_critic_forward.7} parent=5 // pred_fallthru
        _
      %p145 = scmp.le.s32.totalorder 1, %s9
      %p146 = scmp.lt.s32.totalorder %s9, 3
      %p147 = pnand %p145, %p146
      %p148 = pneg %p147
      // Predicated region
      $region29: #{actor_critic_forward.7} parent=5 // pred_check
        _
      $region30: #{actor_critic_forward.7} parent=5 // pred_check_branch
        %150 = sbr.rel (%p147) target = $region32
      $region31: #{actor_critic_forward.7} parent=5 // pred_region
        %s151 = ssub.s32 %s9, 1
        %s152 = smul.u32 4, %s14
        %s153 = ssub.s32 7, %s152
        %p154 = scmp.lt.s32.totalorder %s153, 4
        %s155 = scalar_select %p154, %s153, 4
        %s156 = smul.u32 64, %s155
        %p157 = scmp.lt.s32.totalorder %s152, 6
        %s158 = scalar_select %p157, %s152, 6
        %s159 = smul.addr %s158, 4
        %s160 = scalar_lea.vmem %s0, %s159
        %p161 = pneg %p35
        %p162 = pneg %p32
        %p163 = pneg %p56
        %p164 = pneg %p53
        %p165 = pneg %p77
        %p166 = pneg %p74
        %p167 = pneg %p103
        %p168 = pneg %p100
        %s169 = sand.u32 %s90, 1
        %s170 = sand.u32 %s90, 1
        %s171 = smul.addr %s170, 16
        %s172 = scalar_lea.vmem [#allocation2], %s171
        %s173 = smul.u32 4, %s14
        %s174 = ssub.s32 7, %s173
        %p175 = scmp.lt.s32.totalorder %s174, 4
        %s176 = scalar_select %p175, %s174, 4
        %s177 = smul.u32 64, %s176
        %p178 = scmp.lt.s32.totalorder %s173, 6
        %s179 = scalar_select %p178, %s173, 6
        %s180 = smul.addr %s179, 4
        %s181 = scalar_lea.vmem %s0, %s180
        %s182 = smul.u32 4, %s14
        %s183 = ssub.s32 7, %s182
        %p184 = scmp.lt.s32.totalorder %s183, 4
        %s185 = scalar_select %p184, %s183, 4
        %s186 = smul.u32 64, %s185
        %s187 = smul.u32 4, %s14
        %s188 = ssub.s32 7, %s187
        %p189 = scmp.lt.s32.totalorder %s188, 4
        %s190 = scalar_select %p189, %s188, 4
        %s191 = smul.u32 64, %s190
        %v193 = vld [vmem:[%s181] sm:$0xf]
        %v194 = vld [vmem:[%s181 + $0x4] sm:$0xf]
        %v195 = vld [vmem:[%s181 + $0x8] sm:$0xf]
        %v196 = vld [vmem:[%s181 + $0xc] sm:$0xf]
        %v197 = vld [vmem:[%s1] sm:$0xf]
        %v198 = vld [vmem:[%s1 + $0x4] sm:$0xf]
        %v199 = vld [vmem:[%s1 + $0x8] sm:$0xf]
        %v200 = vld [vmem:[%s1 + $0xc] sm:$0xf]
        %v201 = vld [vmem:[%s1 + $0x10] sm:$0xf]
        %v202 = vld [vmem:[%s1 + $0x14] sm:$0xf]
        %v203 = vld [vmem:[%s1 + $0x18] sm:$0xf]
        %v204 = vld [vmem:[%s1 + $0x1c] sm:$0xf]
        %v205 = vld [vmem:[%s2] sm:$0x1]
        %v207 = vlaneseq
        %v208 = vshrl.u32 %v207, 7
        %v209 = vsub.s32 0, %v208
        %v210 = vrot.slane %v205, %v209
        %v216 = vunpack.c.l.b16 %v193
        %v217 = vunpack.c.l.b16 %v194
        %v218 = vunpack.c.l.b16 %v195
        %v219 = vunpack.c.l.b16 %v196
        %v220 = vpack.c.b16 %v217, %v216
        %v221 = vpack.c.b16 %v219, %v218
        %v230 = vunpack.c.l.b16 %v197
        %v231 = vunpack.c.l.b16 %v198
        %v232 = vunpack.c.l.b16 %v199
        %v233 = vunpack.c.l.b16 %v200
        %v234 = vunpack.c.l.b16 %v201
        %v235 = vunpack.c.l.b16 %v202
        %v236 = vunpack.c.l.b16 %v203
        %v237 = vunpack.c.l.b16 %v204
        %v238 = vpack.c.b16 %v231, %v230
        %v239 = vpack.c.b16 %v233, %v232
        %v240 = vpack.c.b16 %v235, %v234
        %v241 = vpack.c.b16 %v237, %v236
        %vm246 = vcmask 523264
        %v248 = vsel %vm246, %v220, 0
        %v251 = vsel %vm246, %v221, 0
        %253 = vmatprep.subr.bf16.mxu0 0
        %254 = vmatpush1.bf16.msra.mxu0 0
        %255 = vmatprep.subr.bf16.mxu0 0
        %256 = vmatpush1.bf16.msra.mxu0 0
        %257 = vmatprep.subr.bf16.mxu0 0
        %258 = vmatpush1.bf16.msra.mxu0 0
        %259 = vmatprep.subr.bf16.mxu0 0
        %260 = vmatpush1.bf16.msra.mxu0 0
        %261 = vmatprep.subr.bf16.mxu0 0
        %262 = vmatpush1.bf16.msra.mxu0 %v241
        %263 = vmatprep.subr.bf16.mxu0 0
        %264 = vmatpush1.bf16.msra.mxu0 %v240
        %265 = vmatprep.subr.bf16.mxu0 0
        %266 = vmatpush1.bf16.msra.mxu0 %v239
        %267 = vmatprep.subr.bf16.mxu0 0
        %268 = vmatpush1.bf16.msra.mxu0 %v238
        %269 = vmatprep.subr.bf16.mxu0 0
        %270 = vmatpush2.bf16.msra.mxu0 0
        %271 = vmatprep.subr.bf16.mxu0 0
        %272 = vmatpush2.bf16.msra.mxu0 0
        %273 = vmatprep.subr.bf16.mxu0 0
        %274 = vmatpush2.bf16.msra.mxu0 0
        %275 = vmatprep.subr.bf16.mxu0 0
        %276 = vmatpush2.bf16.msra.mxu0 0
        %277 = vmatprep.subr.bf16.mxu0 0
        %278 = vmatpush2.bf16.msra.mxu0 0
        %279 = vmatprep.subr.bf16.mxu0 0
        %280 = vmatpush2.bf16.msra.mxu0 0
        %281 = vmatprep.subr.bf16.mxu0 0
        %282 = vmatpush2.bf16.msra.mxu0 0
        %283 = vmatprep.subr.bf16.mxu0 0
        %284 = vmatpush2.bf16.msra.mxu0 0
        %285 = vmatprep.mubr.bf16.mxu0 0
        %286 = vmatmul.mubr.bf16.gmra.mxu0 %v248
        %v287 = vpop.f32.mrf.mxu0
        %v288 = vadd.f32 %v210, %v287
        %v289 = vpop.f32.mrf.mxu0
        %v290 = vpop.f32.mrf.mxu0
        %v291 = vadd.f32 %v210, %v290
        %v292 = vpop.f32.mrf.mxu0
        %293 = vmatprep.mubr.bf16.mxu0 0
        %294 = vmatmul.mubr.bf16.gmra.mxu0 %v251
        %v295 = vpop.f32.mrf.mxu0
        %v296 = vadd.f32 %v210, %v295
        %v297 = vpop.f32.mrf.mxu0
        %v298 = vpop.f32.mrf.mxu0
        %v299 = vadd.f32 %v210, %v298
        %v300 = vpop.f32.mrf.mxu0
        %301 = vdwg.mxu0
        %v302 = vmax.f32 %v288, 0.0
        %v303 = vmax.f32 %v291, 0.0
        %v304 = vmax.f32 %v296, 0.0
        %v305 = vmax.f32 %v299, 0.0
        %v306 = vpack.c.bf16 %v303, %v302
        %v307 = vpack.c.bf16 %v305, %v304
        %v310 = vunpack.c.l.b16 %v306
        %v311 = vunpack.c.h.b16 %v306
        %v312 = vunpack.c.l.b16 %v307
        %v313 = vunpack.c.h.b16 %v307
        %v314 = vpack.c.b16 %v310, %v310
        %v315 = vpack.c.b16 %v311, %v311
        %v316 = vpack.c.b16 %v312, %v312
        %v317 = vpack.c.b16 %v313, %v313
        %vm322 = vcmask 257024
        %323 = vst.msk [vmem:[%s172] sm:$0xf] %vm322, %v314
        %324 = vst.msk [vmem:[%s172 + $0x4] sm:$0xf] %vm322, %v315
        %325 = vst.msk [vmem:[%s172 + $0x8] sm:$0xf] %vm322, %v316
        %326 = vst.msk [vmem:[%s172 + $0xc] sm:$0xf] %vm322, %v317
        %s327 = sand.u32 %s90, 1
        %s328 = sand.u32 %s90, 1
        %s329 = smul.addr %s328, 16
        %s330 = scalar_lea.vmem [#allocation2], %s329
        // Predicated region
        $region33: #{actor_critic_forward.7} parent=31 // pred_check
          %p331 = pneg %p100
        $region34: #{actor_critic_forward.7} parent=31 // pred_check_branch
          %333 = sbr.rel (%p331) target = $region36
        $region35: #{actor_critic_forward.7} parent=31 // pred_region
          %s334 = smul.u32 4, %s14
          %s335 = ssub.s32 7, %s334
          %p336 = scmp.lt.s32.totalorder %s335, 4
          %s337 = scalar_select %p336, %s335, 4
          %s338 = smul.u32 64, %s337
          %p339 = scmp.ne.s32.totalorder 0, %s338
          %s340 = smul.addr %s334, 4
          %s341 = scalar_lea.vmem %s3, %s340
          // Predicated region
          $region37: #{actor_critic_forward.7} parent=35 // pred_check
            %p342 = pneg %p339
          $region38: #{actor_critic_forward.7} parent=35 // pred_check_branch
            %344 = sbr.rel (%p342) target = $region40
          $region39: #{actor_critic_forward.7} parent=35 // pred_region
            // Predicated region
            $region41: #{actor_critic_forward.7} parent=39 // pred_check
              _
            $region42: #{actor_critic_forward.7} parent=39 // pred_check_branch
              %346 = sbr.rel target = $region44
            $region43: #{actor_critic_forward.7} parent=39 // pred_region
              // Predicated region
              $region63: #{actor_critic_forward.7} parent=43 // pred_check
                _
              $region64: #{actor_critic_forward.7} parent=43 // pred_check_branch
                %402 = sbr.rel (0) target = $region66
              $region65: #{actor_critic_forward.7} parent=43 // pred_region
                %s404 = ssub.s32 16, 1
                %s405 = sshrl.u32 %s337, 2
                // While loop
                $region67: #{actor_critic_forward.7} parent=65 // loop_pre_header
                  _
                $region68: #{actor_critic_forward.7} parent=65 // loop_header
                  %s407 = sphi 0, %s409
                  %p408 = scmp.ge.s32.totalorder %s407, %s405
                  %s412 = sphi 0, %s425
                  %s413 = sphi %s330, %s428
                  %s414 = sphi %s341, %s429
                $region69: #{actor_critic_forward.7} parent=65 // loop_header_branch
                  %411 = sbr.rel (%p408) target = $region73
                $region70: #{actor_critic_forward.7} parent=65 // loop_body
                  %v415 = vld [vmem:[%s413] sm:%s404]
                  %416 = vst [vmem:[%s414] sm:%s404] %v415
                  %v417 = vld [vmem:[%s413 + $0x4] sm:%s404]
                  %418 = vst [vmem:[%s414 + $0x4] sm:%s404] %v417
                  %v419 = vld [vmem:[%s413 + $0x8] sm:%s404]
                  %420 = vst [vmem:[%s414 + $0x8] sm:%s404] %v419
                  %v421 = vld [vmem:[%s413 + $0xc] sm:%s404]
                  %422 = vst [vmem:[%s414 + $0xc] sm:%s404] %v421
                  %s423 = sadd.s32 1, %s412
                  %p424 = scmp.ge.s32.totalorder %s423, %s405
                  %s425 = scalar_select %p424, 0, %s423
                  %s426 = smul.u32 %s425, 16
                  %s427 = smul.u32 %s425, 16
                  %s428 = scalar_lea.vmem %s330, %s426 [#allocation2]
                  %s429 = scalar_lea.vmem %s341, %s427
                $region71: #{actor_critic_forward.7} parent=65 // loop_footer
                  %s409 = sadd.s32 %s407, 1
                $region72: #{actor_critic_forward.7} parent=65 // loop_footer_branch
                  %406 = sbr.rel target = $region68
                $region73: #{actor_critic_forward.7} parent=65 // loop_exit
                  _
                %s430 = sshrl.u32 %s337, 2
                %s431 = sand.u32 %s337, 3
                %s432 = smul.u32 %s430, 4
                %s433 = smul.u32 4, %s432
                %s434 = scalar_lea.vmem %s330, %s433 [#allocation2]
                %s435 = smul.u32 4, %s432
                %s436 = scalar_lea.vmem %s341, %s435
                // While loop
                $region74: #{actor_critic_forward.7} parent=65 // loop_pre_header
                  _
                $region75: #{actor_critic_forward.7} parent=65 // loop_header
                  %s438 = sphi 0, %s440
                  %p439 = scmp.ge.s32.totalorder %s438, %s431
                  %s443 = sphi 0, %s450
                  %s444 = sphi %s434, %s453
                  %s445 = sphi %s436, %s454
                $region76: #{actor_critic_forward.7} parent=65 // loop_header_branch
                  %442 = sbr.rel (%p439) target = $region80
                $region77: #{actor_critic_forward.7} parent=65 // loop_body
                  %v446 = vld [vmem:[%s444] sm:%s404]
                  %447 = vst [vmem:[%s445] sm:%s404] %v446
                  %s448 = sadd.s32 1, %s443
                  %p449 = scmp.ge.s32.totalorder %s448, %s431
                  %s450 = scalar_select %p449, 0, %s448
                  %s451 = smul.u32 %s450, 4
                  %s452 = smul.u32 %s450, 4
                  %s453 = scalar_lea.vmem %s434, %s451 [#allocation2]
                  %s454 = scalar_lea.vmem %s436, %s452
                $region78: #{actor_critic_forward.7} parent=65 // loop_footer
                  %s440 = sadd.s32 %s438, 1
                $region79: #{actor_critic_forward.7} parent=65 // loop_footer_branch
                  %437 = sbr.rel target = $region75
                $region80: #{actor_critic_forward.7} parent=65 // loop_exit
                  _
              $region66: #{actor_critic_forward.7} parent=43 // pred_fallthru
                _
            $region44: #{actor_critic_forward.7} parent=39 // pred_fallthru
              _
            // Predicated region
            $region45: #{actor_critic_forward.7} parent=39 // pred_check
              _
            $region46: #{actor_critic_forward.7} parent=39 // pred_check_branch
              %348 = sbr.rel (0) target = $region48
            $region47: #{actor_critic_forward.7} parent=39 // pred_region
              %s350 = ssub.s32 16, 1
              %s351 = sshrl.u32 %s337, 2
              // While loop
              $region49: #{actor_critic_forward.7} parent=47 // loop_pre_header
                _
              $region50: #{actor_critic_forward.7} parent=47 // loop_header
                %s353 = sphi 0, %s355
                %p354 = scmp.ge.s32.totalorder %s353, %s351
                %s358 = sphi 0, %s371
                %s359 = sphi %s330, %s374
                %s360 = sphi %s341, %s375
              $region51: #{actor_critic_forward.7} parent=47 // loop_header_branch
                %357 = sbr.rel (%p354) target = $region55
              $region52: #{actor_critic_forward.7} parent=47 // loop_body
                %v361 = vld [vmem:[%s359] sm:%s350]
                %362 = vst [vmem:[%s360] sm:%s350] %v361
                %v363 = vld [vmem:[%s359 + $0x4] sm:%s350]
                %364 = vst [vmem:[%s360 + $0x4] sm:%s350] %v363
                %v365 = vld [vmem:[%s359 + $0x8] sm:%s350]
                %366 = vst [vmem:[%s360 + $0x8] sm:%s350] %v365
                %v367 = vld [vmem:[%s359 + $0xc] sm:%s350]
                %368 = vst [vmem:[%s360 + $0xc] sm:%s350] %v367
                %s369 = sadd.s32 1, %s358
                %p370 = scmp.ge.s32.totalorder %s369, %s351
                %s371 = scalar_select %p370, 0, %s369
                %s372 = smul.u32 %s371, 16
                %s373 = smul.u32 %s371, 16
                %s374 = scalar_lea.vmem %s330, %s372 [#allocation2]
                %s375 = scalar_lea.vmem %s341, %s373
              $region53: #{actor_critic_forward.7} parent=47 // loop_footer
                %s355 = sadd.s32 %s353, 1
              $region54: #{actor_critic_forward.7} parent=47 // loop_footer_branch
                %352 = sbr.rel target = $region50
              $region55: #{actor_critic_forward.7} parent=47 // loop_exit
                _
              %s376 = sshrl.u32 %s337, 2
              %s377 = sand.u32 %s337, 3
              %s378 = smul.u32 %s376, 4
              %s379 = smul.u32 4, %s378
              %s380 = scalar_lea.vmem %s330, %s379 [#allocation2]
              %s381 = smul.u32 4, %s378
              %s382 = scalar_lea.vmem %s341, %s381
              // While loop
              $region56: #{actor_critic_forward.7} parent=47 // loop_pre_header
                _
              $region57: #{actor_critic_forward.7} parent=47 // loop_header
                %s384 = sphi 0, %s386
                %p385 = scmp.ge.s32.totalorder %s384, %s377
                %s389 = sphi 0, %s396
                %s390 = sphi %s380, %s399
                %s391 = sphi %s382, %s400
              $region58: #{actor_critic_forward.7} parent=47 // loop_header_branch
                %388 = sbr.rel (%p385) target = $region62
              $region59: #{actor_critic_forward.7} parent=47 // loop_body
                %v392 = vld [vmem:[%s390] sm:%s350]
                %393 = vst [vmem:[%s391] sm:%s350] %v392
                %s394 = sadd.s32 1, %s389
                %p395 = scmp.ge.s32.totalorder %s394, %s377
                %s396 = scalar_select %p395, 0, %s394
                %s397 = smul.u32 %s396, 4
                %s398 = smul.u32 %s396, 4
                %s399 = scalar_lea.vmem %s380, %s397 [#allocation2]
                %s400 = scalar_lea.vmem %s382, %s398
              $region60: #{actor_critic_forward.7} parent=47 // loop_footer
                %s386 = sadd.s32 %s384, 1
              $region61: #{actor_critic_forward.7} parent=47 // loop_footer_branch
                %383 = sbr.rel target = $region57
              $region62: #{actor_critic_forward.7} parent=47 // loop_exit
                _
            $region48: #{actor_critic_forward.7} parent=39 // pred_fallthru
              _
          $region40: #{actor_critic_forward.7} parent=35 // pred_fallthru
            _
          %455 = vnop
        $region36: #{actor_critic_forward.7} parent=31 // pred_fallthru
          _
      $region32: #{actor_critic_forward.7} parent=5 // pred_fallthru
        _
      %p456 = scmp.le.s32.totalorder 2, %s9
      // Predicated region
      $region81: #{actor_critic_forward.7} parent=5 // pred_check
        %p457 = pneg %p456
      $region82: #{actor_critic_forward.7} parent=5 // pred_check_branch
        %459 = sbr.rel (%p457) target = $region84
      $region83: #{actor_critic_forward.7} parent=5 // pred_region
        %s460 = ssub.s32 %s9, 2
        // Predicated region
        $region85: #{actor_critic_forward.7} parent=83 // pred_check
          %p461 = pneg %p106
        $region86: #{actor_critic_forward.7} parent=83 // pred_check_branch
          %463 = sbr.rel (%p461) target = $region88
        $region87: #{actor_critic_forward.7} parent=83 // pred_region
          %s464 = sand.u32 %s91, 1
          %s465 = sand.u32 %s91, 1
          %s466 = smul.addr %s465, 16
          %s467 = scalar_lea.vmem [#allocation2], %s466
        $region88: #{actor_critic_forward.7} parent=83 // pred_fallthru
          _
      $region84: #{actor_critic_forward.7} parent=5 // pred_fallthru
        _
    $region6: #{actor_critic_forward.7} parent=1 // loop_footer
      %s13 = sadd.s32 1, %s9
    $region7: #{actor_critic_forward.7} parent=1 // loop_footer_branch
      %8 = sbr.rel target = $region3
    $region8: #{actor_critic_forward.7} parent=1 // loop_exit
      _

// kernel: actor_critic_forward.8
$region0: #{actor_critic_forward.8}
  #allocation0 [shape = 'u32[]', space=smem, size = 0x4, offset = 0x4, fixed_abs, tag = 'smem constant byte address 0x4 - core index']
  #allocation1 [shape = 'u32[144,128]{1,0:T(1,128)}', space=vmem, size = 0x12000, scoped, tag = 'internal scratch']
  %s0 = inlined_call_operand.vmem [shape: bf16[18,288], index: 0, kind: input, shape index: {}]
  %s1 = inlined_call_operand.vmem [shape: bf16[288,32], index: 1, kind: input, shape index: {}]
  %s2 = inlined_call_operand.vmem [shape: f32[1,32], index: 2, kind: input, shape index: {}]
  %s3 = inlined_call_operand.vmem [shape: bf16[18,32], index: 3, kind: output, shape index: {}]
  %s4 = sld [smem:[#allocation0]]
  $region22: #{actor_critic_forward.8} parent=0
    _
  %s6 = ssub.s32 1, %s4
  %s7 = scalar_select 0, %s6, %s4
  // Predicated region
  $region2: #{actor_critic_forward.8} parent=0 // pred_check
    _
  $region3: #{actor_critic_forward.8} parent=0 // pred_check_branch
    %9 = sbr.rel (0) target = $region5
  $region4: #{actor_critic_forward.8} parent=0 // pred_region
    _
  $region5: #{actor_critic_forward.8} parent=0 // pred_fallthru
    _
  // Predicated region
  $region6: #{actor_critic_forward.8} parent=0 // pred_check
    _
  $region7: #{actor_critic_forward.8} parent=0 // pred_check_branch
    %11 = sbr.rel (0) target = $region9
  $region8: #{actor_critic_forward.8} parent=0 // pred_region
    _
  $region9: #{actor_critic_forward.8} parent=0 // pred_fallthru
    _
  // Predicated region
  $region10: #{actor_critic_forward.8} parent=0 // pred_check
    _
  $region11: #{actor_critic_forward.8} parent=0 // pred_check_branch
    %13 = sbr.rel (0) target = $region13
  $region12: #{actor_critic_forward.8} parent=0 // pred_region
    _
  $region13: #{actor_critic_forward.8} parent=0 // pred_fallthru
    _
  %v15 = vld [vmem:[%s0] sm:$0xff]
  %v16 = vld [vmem:[%s0 + $0x8] sm:$0xf]
  %v17 = vld [vmem:[%s0 + $0xc] sm:$0xff]
  %v18 = vld [vmem:[%s0 + $0x14] sm:$0xf]
  %v19 = vld [vmem:[%s0 + $0x18] sm:$0x11]
  %v20 = vld [vmem:[%s0 + $0x20] sm:$0x1]
  %v21 = vld [vmem:[%s1] sm:$0xf]
  %v22 = vld [vmem:[%s1 + $0x4] sm:$0xf]
  %v23 = vld [vmem:[%s1 + $0x8] sm:$0xf]
  %v24 = vld [vmem:[%s1 + $0xc] sm:$0xf]
  %v25 = vld [vmem:[%s1 + $0x10] sm:$0xf]
  %v26 = vld [vmem:[%s1 + $0x14] sm:$0xf]
  %v27 = vld [vmem:[%s1 + $0x18] sm:$0xf]
  %v28 = vld [vmem:[%s1 + $0x1c] sm:$0xf]
  %v29 = vld [vmem:[%s1 + $0x20] sm:$0xf]
  %v30 = vld [vmem:[%s1 + $0x24] sm:$0xf]
  %v31 = vld [vmem:[%s1 + $0x28] sm:$0xf]
  %v32 = vld [vmem:[%s1 + $0x2c] sm:$0xf]
  %v33 = vld [vmem:[%s1 + $0x30] sm:$0xf]
  %v34 = vld [vmem:[%s1 + $0x34] sm:$0xf]
  %v35 = vld [vmem:[%s1 + $0x38] sm:$0xf]
  %v36 = vld [vmem:[%s1 + $0x3c] sm:$0xf]
  %v37 = vld [vmem:[%s1 + $0x40] sm:$0xf]
  %v38 = vld [vmem:[%s1 + $0x44] sm:$0xf]
  %v39 = vld [vmem:[%s1 + $0x48] sm:$0xf]
  %v40 = vld [vmem:[%s1 + $0x4c] sm:$0xf]
  %v41 = vld [vmem:[%s1 + $0x50] sm:$0xf]
  %v42 = vld [vmem:[%s1 + $0x54] sm:$0xf]
  %v43 = vld [vmem:[%s1 + $0x58] sm:$0xf]
  %v44 = vld [vmem:[%s1 + $0x5c] sm:$0xf]
  %v45 = vld [vmem:[%s1 + $0x60] sm:$0xf]
  %v46 = vld [vmem:[%s1 + $0x64] sm:$0xf]
  %v47 = vld [vmem:[%s1 + $0x68] sm:$0xf]
  %v48 = vld [vmem:[%s1 + $0x6c] sm:$0xf]
  %v49 = vld [vmem:[%s1 + $0x70] sm:$0xf]
  %v50 = vld [vmem:[%s1 + $0x74] sm:$0xf]
  %v51 = vld [vmem:[%s1 + $0x78] sm:$0xf]
  %v52 = vld [vmem:[%s1 + $0x7c] sm:$0xf]
  %v53 = vld [vmem:[%s1 + $0x80] sm:$0xf]
  %v54 = vld [vmem:[%s1 + $0x84] sm:$0xf]
  %v55 = vld [vmem:[%s1 + $0x88] sm:$0xf]
  %v56 = vld [vmem:[%s1 + $0x8c] sm:$0xf]
  %v57 = vld [vmem:[%s2] sm:$0x1]
  %v59 = vlaneseq
  %v60 = vshrl.u32 %v59, 7
  %v61 = vsub.s32 0, %v60
  %v62 = vrot.slane %v57, %v61
  %v70 = vunpack.c.l.b16 %v15
  %v71 = vunpack.c.h.b16 %v15
  %v72 = vunpack.c.l.b16 %v16
  %v73 = vunpack.c.l.b16 %v17
  %v74 = vunpack.c.h.b16 %v17
  %v75 = vunpack.c.l.b16 %v18
  %v76 = vunpack.c.l.b16 %v19
  %v77 = vunpack.c.h.b16 %v19
  %v78 = vunpack.c.l.b16 %v20
  %v79 = vpack.c.b16 %v73, %v70
  %v80 = vpack.c.b16 %v74, %v71
  %v81 = vpack.c.b16 %v75, %v72
  %v82 = vpack.c.b16 %v76, %v76
  %v83 = vpack.c.b16 %v77, %v77
  %v84 = vpack.c.b16 %v78, %v78
  %v125 = vunpack.c.l.b16 %v21
  %v126 = vunpack.c.l.b16 %v22
  %v127 = vunpack.c.l.b16 %v23
  %v128 = vunpack.c.l.b16 %v24
  %v129 = vunpack.c.l.b16 %v25
  %v130 = vunpack.c.l.b16 %v26
  %v131 = vunpack.c.l.b16 %v27
  %v132 = vunpack.c.l.b16 %v28
  %v133 = vunpack.c.l.b16 %v29
  %v134 = vunpack.c.l.b16 %v30
  %v135 = vunpack.c.l.b16 %v31
  %v136 = vunpack.c.l.b16 %v32
  %v137 = vunpack.c.l.b16 %v33
  %v138 = vunpack.c.l.b16 %v34
  %v139 = vunpack.c.l.b16 %v35
  %v140 = vunpack.c.l.b16 %v36
  %v141 = vunpack.c.l.b16 %v37
  %v142 = vunpack.c.l.b16 %v38
  %v143 = vunpack.c.l.b16 %v39
  %v144 = vunpack.c.l.b16 %v40
  %v145 = vunpack.c.l.b16 %v41
  %v146 = vunpack.c.l.b16 %v42
  %v147 = vunpack.c.l.b16 %v43
  %v148 = vunpack.c.l.b16 %v44
  %v149 = vunpack.c.l.b16 %v45
  %v150 = vunpack.c.l.b16 %v46
  %v151 = vunpack.c.l.b16 %v47
  %v152 = vunpack.c.l.b16 %v48
  %v153 = vunpack.c.l.b16 %v49
  %v154 = vunpack.c.l.b16 %v50
  %v155 = vunpack.c.l.b16 %v51
  %v156 = vunpack.c.l.b16 %v52
  %v157 = vunpack.c.l.b16 %v53
  %v158 = vunpack.c.l.b16 %v54
  %v159 = vunpack.c.l.b16 %v55
  %v160 = vunpack.c.l.b16 %v56
  %v161 = vpack.c.b16 %v126, %v125
  %v162 = vpack.c.b16 %v128, %v127
  %v163 = vpack.c.b16 %v130, %v129
  %v164 = vpack.c.b16 %v132, %v131
  %v165 = vpack.c.b16 %v134, %v133
  %v166 = vpack.c.b16 %v136, %v135
  %v167 = vpack.c.b16 %v138, %v137
  %v168 = vpack.c.b16 %v140, %v139
  %v169 = vpack.c.b16 %v142, %v141
  %v170 = vpack.c.b16 %v144, %v143
  %v171 = vpack.c.b16 %v146, %v145
  %v172 = vpack.c.b16 %v148, %v147
  %v173 = vpack.c.b16 %v150, %v149
  %v174 = vpack.c.b16 %v152, %v151
  %v175 = vpack.c.b16 %v154, %v153
  %v176 = vpack.c.b16 %v156, %v155
  %v177 = vpack.c.b16 %v158, %v157
  %v178 = vpack.c.b16 %v160, %v159
  %vm197 = vcmask 261120
  %v199 = vsel %vm197, %v81, 0
  %v202 = vsel %vm197, %v84, 0
  %204 = vmatprep.subr.bf16.mxu0 0
  %205 = vmatpush1.bf16.msra.mxu0 %v168
  %206 = vmatprep.subr.bf16.mxu0 0
  %207 = vmatpush1.bf16.msra.mxu0 %v167
  %208 = vmatprep.subr.bf16.mxu0 0
  %209 = vmatpush1.bf16.msra.mxu0 %v166
  %210 = vmatprep.subr.bf16.mxu0 0
  %211 = vmatpush1.bf16.msra.mxu0 %v165
  %212 = vmatprep.subr.bf16.mxu0 0
  %213 = vmatpush1.bf16.msra.mxu0 %v164
  %214 = vmatprep.subr.bf16.mxu0 0
  %215 = vmatpush1.bf16.msra.mxu0 %v163
  %216 = vmatprep.subr.bf16.mxu0 0
  %217 = vmatpush1.bf16.msra.mxu0 %v162
  %218 = vmatprep.subr.bf16.mxu0 0
  %219 = vmatpush1.bf16.msra.mxu0 %v161
  %220 = vmatprep.subr.bf16.mxu0 0
  %221 = vmatpush2.bf16.msra.mxu0 %v176
  %222 = vmatprep.subr.bf16.mxu0 0
  %223 = vmatpush2.bf16.msra.mxu0 %v175
  %224 = vmatprep.subr.bf16.mxu0 0
  %225 = vmatpush2.bf16.msra.mxu0 %v174
  %226 = vmatprep.subr.bf16.mxu0 0
  %227 = vmatpush2.bf16.msra.mxu0 %v173
  %228 = vmatprep.subr.bf16.mxu0 0
  %229 = vmatpush2.bf16.msra.mxu0 %v172
  %230 = vmatprep.subr.bf16.mxu0 0
  %231 = vmatpush2.bf16.msra.mxu0 %v171
  %232 = vmatprep.subr.bf16.mxu0 0
  %233 = vmatpush2.bf16.msra.mxu0 %v170
  %234 = vmatprep.subr.bf16.mxu0 0
  %235 = vmatpush2.bf16.msra.mxu0 %v169
  %236 = vmatprep.mubr.bf16.mxu0 %v80
  %237 = vmatmul.mubr.bf16.gmra.mxu0 %v79
  %v238 = vpop.f32.mrf.mxu0
  %v239 = vadd.f32 %v62, %v238
  %v240 = vpop.f32.mrf.mxu0
  %v241 = vpop.f32.mrf.mxu0
  %v242 = vadd.f32 %v62, %v241
  %v243 = vpop.f32.mrf.mxu0
  %244 = vmatprep.mubr.bf16.mxu0 %v83
  %245 = vmatmul.mubr.bf16.gmra.mxu0 %v82
  %v246 = vpop.f32.mrf.mxu0
  %v247 = vadd.f32 %v62, %v246
  %v248 = vpop.f32.mrf.mxu0
  %v249 = vpop.f32.mrf.mxu0
  %v250 = vpop.f32.mrf.mxu0
  %251 = vdwg.mxu0
  %252 = vmatprep.subr.bf16.mxu0 0
  %253 = vmatpush1.bf16.msra.mxu0 0
  %254 = vmatprep.subr.bf16.mxu0 0
  %255 = vmatpush1.bf16.msra.mxu0 0
  %256 = vmatprep.subr.bf16.mxu0 0
  %257 = vmatpush1.bf16.msra.mxu0 0
  %258 = vmatprep.subr.bf16.mxu0 0
  %259 = vmatpush1.bf16.msra.mxu0 0
  %260 = vmatprep.subr.bf16.mxu0 0
  %261 = vmatpush1.bf16.msra.mxu0 0
  %262 = vmatprep.subr.bf16.mxu0 0
  %263 = vmatpush1.bf16.msra.mxu0 0
  %264 = vmatprep.subr.bf16.mxu0 0
  %265 = vmatpush1.bf16.msra.mxu0 %v178
  %266 = vmatprep.subr.bf16.mxu0 0
  %267 = vmatpush1.bf16.msra.mxu0 %v177
  %268 = vmatprep.subr.bf16.mxu0 0
  %269 = vmatpush2.bf16.msra.mxu0 0
  %270 = vmatprep.subr.bf16.mxu0 0
  %271 = vmatpush2.bf16.msra.mxu0 0
  %272 = vmatprep.subr.bf16.mxu0 0
  %273 = vmatpush2.bf16.msra.mxu0 0
  %274 = vmatprep.subr.bf16.mxu0 0
  %275 = vmatpush2.bf16.msra.mxu0 0
  %276 = vmatprep.subr.bf16.mxu0 0
  %277 = vmatpush2.bf16.msra.mxu0 0
  %278 = vmatprep.subr.bf16.mxu0 0
  %279 = vmatpush2.bf16.msra.mxu0 0
  %280 = vmatprep.subr.bf16.mxu0 0
  %281 = vmatpush2.bf16.msra.mxu0 0
  %282 = vmatprep.subr.bf16.mxu0 0
  %283 = vmatpush2.bf16.msra.mxu0 0
  %284 = vmatprep.mubr.bf16.mxu0 0
  %285 = vmatmul.mubr.bf16.gmra.mxu0 %v199
  %v286 = vpop.f32.mrf.mxu0
  %v287 = vadd.f32 %v239, %v286
  %v288 = vpop.f32.mrf.mxu0
  %v289 = vpop.f32.mrf.mxu0
  %v290 = vadd.f32 %v242, %v289
  %v291 = vpop.f32.mrf.mxu0
  %292 = vmatprep.mubr.bf16.mxu0 0
  %293 = vmatmul.mubr.bf16.gmra.mxu0 %v202
  %v294 = vpop.f32.mrf.mxu0
  %v295 = vadd.f32 %v247, %v294
  %v296 = vpop.f32.mrf.mxu0
  %v297 = vpop.f32.mrf.mxu0
  %v298 = vpop.f32.mrf.mxu0
  %299 = vdwg.mxu0
  %v300 = vmax.f32 %v287, 0.0
  %v301 = vmax.f32 %v290, 0.0
  %v302 = vmax.f32 %v295, 0.0
  %v303 = vpack.c.bf16 %v301, %v300
  %v304 = vpack.c.bf16 %v302, %v302
  %v307 = vunpack.c.l.b16 %v303
  %v308 = vunpack.c.h.b16 %v303
  %v309 = vunpack.c.l.b16 %v304
  %v310 = vpack.c.b16 %v307, %v307
  %v311 = vpack.c.b16 %v308, %v308
  %v312 = vpack.c.b16 %v309, %v309
  %vm316 = vcmask 257024
  %317 = vst.msk [vmem:[%s3] sm:$0xf] %vm316, %v310
  %318 = vst.msk [vmem:[%s3 + $0x4] sm:$0xf] %vm316, %v311
  %vm319 = vcmask 253952
  %320 = vst.msk [vmem:[%s3 + $0x8] sm:$0x1] %vm319, %v312
  // Predicated region
  $region14: #{actor_critic_forward.8} parent=0 // pred_check
    _
  $region15: #{actor_critic_forward.8} parent=0 // pred_check_branch
    %322 = sbr.rel (0) target = $region17
  $region16: #{actor_critic_forward.8} parent=0 // pred_region
    _
  $region17: #{actor_critic_forward.8} parent=0 // pred_fallthru
    _
  // Predicated region
  $region18: #{actor_critic_forward.8} parent=0 // pred_check
    _
  $region19: #{actor_critic_forward.8} parent=0 // pred_check_branch
    %324 = sbr.rel (0) target = $region21
  $region20: #{actor_critic_forward.8} parent=0 // pred_region
    _
  $region21: #{actor_critic_forward.8} parent=0 // pred_fallthru
    _

// kernel: actor_critic_forward.9
$region0: #{actor_critic_forward.9}
  #allocation0 [shape = 'u32[]', space=smem, size = 0x4, offset = 0x4, fixed_abs, tag = 'smem constant byte address 0x4 - core index']
  #allocation1 [shape = 'u32[144,128]{1,0:T(1,128)}', space=vmem, size = 0x12000, scoped, tag = 'internal scratch']
  %s0 = inlined_call_operand.vmem [shape: bf16[8,288], index: 0, kind: input, shape index: {}]
  %s1 = inlined_call_operand.vmem [shape: bf16[288,64], index: 1, kind: input, shape index: {}]
  %s2 = inlined_call_operand.vmem [shape: f32[1,64], index: 2, kind: input, shape index: {}]
  %s3 = inlined_call_operand.vmem [shape: bf16[8,64], index: 3, kind: output, shape index: {}]
  %s4 = sld [smem:[#allocation0]]
  $region22: #{actor_critic_forward.9} parent=0
    _
  %s6 = ssub.s32 1, %s4
  %s7 = scalar_select 0, %s6, %s4
  // Predicated region
  $region2: #{actor_critic_forward.9} parent=0 // pred_check
    _
  $region3: #{actor_critic_forward.9} parent=0 // pred_check_branch
    %9 = sbr.rel (0) target = $region5
  $region4: #{actor_critic_forward.9} parent=0 // pred_region
    _
  $region5: #{actor_critic_forward.9} parent=0 // pred_fallthru
    _
  // Predicated region
  $region6: #{actor_critic_forward.9} parent=0 // pred_check
    _
  $region7: #{actor_critic_forward.9} parent=0 // pred_check_branch
    %11 = sbr.rel (0) target = $region9
  $region8: #{actor_critic_forward.9} parent=0 // pred_region
    _
  $region9: #{actor_critic_forward.9} parent=0 // pred_fallthru
    _
  // Predicated region
  $region10: #{actor_critic_forward.9} parent=0 // pred_check
    _
  $region11: #{actor_critic_forward.9} parent=0 // pred_check_branch
    %13 = sbr.rel (0) target = $region13
  $region12: #{actor_critic_forward.9} parent=0 // pred_region
    _
  $region13: #{actor_critic_forward.9} parent=0 // pred_fallthru
    _
  %v15 = vld [vmem:[%s0] sm:$0xff]
  %v16 = vld [vmem:[%s0 + $0x8] sm:$0xf]
  %v17 = vld [vmem:[%s1] sm:$0xf]
  %v18 = vld [vmem:[%s1 + $0x4] sm:$0xf]
  %v19 = vld [vmem:[%s1 + $0x8] sm:$0xf]
  %v20 = vld [vmem:[%s1 + $0xc] sm:$0xf]
  %v21 = vld [vmem:[%s1 + $0x10] sm:$0xf]
  %v22 = vld [vmem:[%s1 + $0x14] sm:$0xf]
  %v23 = vld [vmem:[%s1 + $0x18] sm:$0xf]
  %v24 = vld [vmem:[%s1 + $0x1c] sm:$0xf]
  %v25 = vld [vmem:[%s1 + $0x20] sm:$0xf]
  %v26 = vld [vmem:[%s1 + $0x24] sm:$0xf]
  %v27 = vld [vmem:[%s1 + $0x28] sm:$0xf]
  %v28 = vld [vmem:[%s1 + $0x2c] sm:$0xf]
  %v29 = vld [vmem:[%s1 + $0x30] sm:$0xf]
  %v30 = vld [vmem:[%s1 + $0x34] sm:$0xf]
  %v31 = vld [vmem:[%s1 + $0x38] sm:$0xf]
  %v32 = vld [vmem:[%s1 + $0x3c] sm:$0xf]
  %v33 = vld [vmem:[%s1 + $0x40] sm:$0xf]
  %v34 = vld [vmem:[%s1 + $0x44] sm:$0xf]
  %v35 = vld [vmem:[%s1 + $0x48] sm:$0xf]
  %v36 = vld [vmem:[%s1 + $0x4c] sm:$0xf]
  %v37 = vld [vmem:[%s1 + $0x50] sm:$0xf]
  %v38 = vld [vmem:[%s1 + $0x54] sm:$0xf]
  %v39 = vld [vmem:[%s1 + $0x58] sm:$0xf]
  %v40 = vld [vmem:[%s1 + $0x5c] sm:$0xf]
  %v41 = vld [vmem:[%s1 + $0x60] sm:$0xf]
  %v42 = vld [vmem:[%s1 + $0x64] sm:$0xf]
  %v43 = vld [vmem:[%s1 + $0x68] sm:$0xf]
  %v44 = vld [vmem:[%s1 + $0x6c] sm:$0xf]
  %v45 = vld [vmem:[%s1 + $0x70] sm:$0xf]
  %v46 = vld [vmem:[%s1 + $0x74] sm:$0xf]
  %v47 = vld [vmem:[%s1 + $0x78] sm:$0xf]
  %v48 = vld [vmem:[%s1 + $0x7c] sm:$0xf]
  %v49 = vld [vmem:[%s1 + $0x80] sm:$0xf]
  %v50 = vld [vmem:[%s1 + $0x84] sm:$0xf]
  %v51 = vld [vmem:[%s1 + $0x88] sm:$0xf]
  %v52 = vld [vmem:[%s1 + $0x8c] sm:$0xf]
  %v53 = vld [vmem:[%s2] sm:$0x1]
  %v55 = vlaneseq
  %v56 = vshrl.u32 %v55, 7
  %v57 = vsub.s32 0, %v56
  %v58 = vrot.slane %v53, %v57
  %v62 = vunpack.c.l.b16 %v15
  %v63 = vunpack.c.h.b16 %v15
  %v64 = vunpack.c.l.b16 %v16
  %v65 = vpack.c.b16 %v62, %v62
  %v66 = vpack.c.b16 %v63, %v63
  %v67 = vpack.c.b16 %v64, %v64
  %v106 = vunpack.c.l.b16 %v17
  %v107 = vunpack.c.l.b16 %v18
  %v108 = vunpack.c.l.b16 %v19
  %v109 = vunpack.c.l.b16 %v20
  %v110 = vunpack.c.l.b16 %v21
  %v111 = vunpack.c.l.b16 %v22
  %v112 = vunpack.c.l.b16 %v23
  %v113 = vunpack.c.l.b16 %v24
  %v114 = vunpack.c.l.b16 %v25
  %v115 = vunpack.c.l.b16 %v26
  %v116 = vunpack.c.l.b16 %v27
  %v117 = vunpack.c.l.b16 %v28
  %v118 = vunpack.c.l.b16 %v29
  %v119 = vunpack.c.l.b16 %v30
  %v120 = vunpack.c.l.b16 %v31
  %v121 = vunpack.c.l.b16 %v32
  %v122 = vunpack.c.l.b16 %v33
  %v123 = vunpack.c.l.b16 %v34
  %v124 = vunpack.c.l.b16 %v35
  %v125 = vunpack.c.l.b16 %v36
  %v126 = vunpack.c.l.b16 %v37
  %v127 = vunpack.c.l.b16 %v38
  %v128 = vunpack.c.l.b16 %v39
  %v129 = vunpack.c.l.b16 %v40
  %v130 = vunpack.c.l.b16 %v41
  %v131 = vunpack.c.l.b16 %v42
  %v132 = vunpack.c.l.b16 %v43
  %v133 = vunpack.c.l.b16 %v44
  %v134 = vunpack.c.l.b16 %v45
  %v135 = vunpack.c.l.b16 %v46
  %v136 = vunpack.c.l.b16 %v47
  %v137 = vunpack.c.l.b16 %v48
  %v138 = vunpack.c.l.b16 %v49
  %v139 = vunpack.c.l.b16 %v50
  %v140 = vunpack.c.l.b16 %v51
  %v141 = vunpack.c.l.b16 %v52
  %v142 = vpack.c.b16 %v107, %v106
  %v143 = vpack.c.b16 %v109, %v108
  %v144 = vpack.c.b16 %v111, %v110
  %v145 = vpack.c.b16 %v113, %v112
  %v146 = vpack.c.b16 %v115, %v114
  %v147 = vpack.c.b16 %v117, %v116
  %v148 = vpack.c.b16 %v119, %v118
  %v149 = vpack.c.b16 %v121, %v120
  %v150 = vpack.c.b16 %v123, %v122
  %v151 = vpack.c.b16 %v125, %v124
  %v152 = vpack.c.b16 %v127, %v126
  %v153 = vpack.c.b16 %v129, %v128
  %v154 = vpack.c.b16 %v131, %v130
  %v155 = vpack.c.b16 %v133, %v132
  %v156 = vpack.c.b16 %v135, %v134
  %v157 = vpack.c.b16 %v137, %v136
  %v158 = vpack.c.b16 %v139, %v138
  %v159 = vpack.c.b16 %v141, %v140
  %vm178 = vcmask 261120
  %v180 = vsel %vm178, %v67, 0
  %182 = vmatprep.subr.bf16.mxu0 0
  %183 = vmatpush1.bf16.msra.mxu0 %v149
  %184 = vmatprep.subr.bf16.mxu0 0
  %185 = vmatpush1.bf16.msra.mxu0 %v148
  %186 = vmatprep.subr.bf16.mxu0 0
  %187 = vmatpush1.bf16.msra.mxu0 %v147
  %188 = vmatprep.subr.bf16.mxu0 0
  %189 = vmatpush1.bf16.msra.mxu0 %v146
  %190 = vmatprep.subr.bf16.mxu0 0
  %191 = vmatpush1.bf16.msra.mxu0 %v145
  %192 = vmatprep.subr.bf16.mxu0 0
  %193 = vmatpush1.bf16.msra.mxu0 %v144
  %194 = vmatprep.subr.bf16.mxu0 0
  %195 = vmatpush1.bf16.msra.mxu0 %v143
  %196 = vmatprep.subr.bf16.mxu0 0
  %197 = vmatpush1.bf16.msra.mxu0 %v142
  %198 = vmatprep.subr.bf16.mxu0 0
  %199 = vmatpush2.bf16.msra.mxu0 %v157
  %200 = vmatprep.subr.bf16.mxu0 0
  %201 = vmatpush2.bf16.msra.mxu0 %v156
  %202 = vmatprep.subr.bf16.mxu0 0
  %203 = vmatpush2.bf16.msra.mxu0 %v155
  %204 = vmatprep.subr.bf16.mxu0 0
  %205 = vmatpush2.bf16.msra.mxu0 %v154
  %206 = vmatprep.subr.bf16.mxu0 0
  %207 = vmatpush2.bf16.msra.mxu0 %v153
  %208 = vmatprep.subr.bf16.mxu0 0
  %209 = vmatpush2.bf16.msra.mxu0 %v152
  %210 = vmatprep.subr.bf16.mxu0 0
  %211 = vmatpush2.bf16.msra.mxu0 %v151
  %212 = vmatprep.subr.bf16.mxu0 0
  %213 = vmatpush2.bf16.msra.mxu0 %v150
  %214 = vmatprep.mubr.bf16.mxu0 %v66
  %215 = vmatmul.mubr.bf16.gmra.mxu0 %v65
  %v216 = vpop.f32.mrf.mxu0
  %v217 = vadd.f32 %v58, %v216
  %v218 = vpop.f32.mrf.mxu0
  %v219 = vpop.f32.mrf.mxu0
  %v220 = vpop.f32.mrf.mxu0
  %221 = vdwg.mxu0
  %222 = vmatprep.subr.bf16.mxu0 0
  %223 = vmatpush1.bf16.msra.mxu0 0
  %224 = vmatprep.subr.bf16.mxu0 0
  %225 = vmatpush1.bf16.msra.mxu0 0
  %226 = vmatprep.subr.bf16.mxu0 0
  %227 = vmatpush1.bf16.msra.mxu0 0
  %228 = vmatprep.subr.bf16.mxu0 0
  %229 = vmatpush1.bf16.msra.mxu0 0
  %230 = vmatprep.subr.bf16.mxu0 0
  %231 = vmatpush1.bf16.msra.mxu0 0
  %232 = vmatprep.subr.bf16.mxu0 0
  %233 = vmatpush1.bf16.msra.mxu0 0
  %234 = vmatprep.subr.bf16.mxu0 0
  %235 = vmatpush1.bf16.msra.mxu0 %v159
  %236 = vmatprep.subr.bf16.mxu0 0
  %237 = vmatpush1.bf16.msra.mxu0 %v158
  %238 = vmatprep.subr.bf16.mxu0 0
  %239 = vmatpush2.bf16.msra.mxu0 0
  %240 = vmatprep.subr.bf16.mxu0 0
  %241 = vmatpush2.bf16.msra.mxu0 0
  %242 = vmatprep.subr.bf16.mxu0 0
  %243 = vmatpush2.bf16.msra.mxu0 0
  %244 = vmatprep.subr.bf16.mxu0 0
  %245 = vmatpush2.bf16.msra.mxu0 0
  %246 = vmatprep.subr.bf16.mxu0 0
  %247 = vmatpush2.bf16.msra.mxu0 0
  %248 = vmatprep.subr.bf16.mxu0 0
  %249 = vmatpush2.bf16.msra.mxu0 0
  %250 = vmatprep.subr.bf16.mxu0 0
  %251 = vmatpush2.bf16.msra.mxu0 0
  %252 = vmatprep.subr.bf16.mxu0 0
  %253 = vmatpush2.bf16.msra.mxu0 0
  %254 = vmatprep.mubr.bf16.mxu0 0
  %255 = vmatmul.mubr.bf16.gmra.mxu0 %v180
  %v256 = vpop.f32.mrf.mxu0
  %v257 = vadd.f32 %v217, %v256
  %v258 = vpop.f32.mrf.mxu0
  %v259 = vpop.f32.mrf.mxu0
  %v260 = vpop.f32.mrf.mxu0
  %261 = vdwg.mxu0
  %v262 = vmax.f32 %v257, 0.0
  %v263 = vpack.c.bf16 %v262, %v262
  %vm264 = vcmask 519168
  %265 = vst.msk [vmem:[%s3] sm:$0xf] %vm264, %v263
  // Predicated region
  $region14: #{actor_critic_forward.9} parent=0 // pred_check
    _
  $region15: #{actor_critic_forward.9} parent=0 // pred_check_branch
    %267 = sbr.rel (0) target = $region17
  $region16: #{actor_critic_forward.9} parent=0 // pred_region
    _
  $region17: #{actor_critic_forward.9} parent=0 // pred_fallthru
    _
  // Predicated region
  $region18: #{actor_critic_forward.9} parent=0 // pred_check
    _
  $region19: #{actor_critic_forward.9} parent=0 // pred_check_branch
    %269 = sbr.rel (0) target = $region21
  $region20: #{actor_critic_forward.9} parent=0 // pred_region
    _
  $region21: #{actor_critic_forward.9} parent=0 // pred_fallthru
    _

// kernel: actor_critic_forward.12
$region0: #{actor_critic_forward.12}
  #allocation0 [shape = 'u32[]', space=smem, size = 0x4, offset = 0x4, fixed_abs, tag = 'smem constant byte address 0x4 - core index']
  #allocation1 [shape = 'u32[144,128]{1,0:T(1,128)}', space=vmem, size = 0x12000, scoped, tag = 'internal scratch']
  %s0 = inlined_call_operand.vmem [shape: bf16[2,1,1,9,64], index: 0, kind: input, shape index: {}, may-alias: {0,4}]
  %s1 = inlined_call_operand.vmem [shape: bf16[2,576], index: 1, kind: input, shape index: {}]
  %s2 = inlined_call_operand.vmem [shape: bf16[576,64], index: 2, kind: input, shape index: {}]
  %s3 = inlined_call_operand.vmem [shape: f32[1,64], index: 3, kind: input, shape index: {}]
  %s4 = inlined_call_operand.vmem [shape: bf16[2,1,1,9,64], index: 4, kind: output, shape index: {}, may-alias: {0,4}]
  %s5 = scalar_lea.vmem %s4, 4
  %s6 = sld [smem:[#allocation0]]
  $region52: #{actor_critic_forward.12} parent=0
    _
  %s8 = ssub.s32 1, %s6
  %s9 = scalar_select 0, %s8, %s6
  $region1: #{actor_critic_forward.12} parent=0
    #allocation2 [shape = 'u8[512]{0}', space=vmem, size = 0x400, scoped, tag = 'output window, operand 0, single buffered']
    // Predicated region
    $region2: #{actor_critic_forward.12} parent=1 // pred_check
      _
    $region3: #{actor_critic_forward.12} parent=1 // pred_check_branch
      %11 = sbr.rel (0) target = $region5
    $region4: #{actor_critic_forward.12} parent=1 // pred_region
      _
    $region5: #{actor_critic_forward.12} parent=1 // pred_fallthru
      _
    // Predicated region
    $region6: #{actor_critic_forward.12} parent=1 // pred_check
      _
    $region7: #{actor_critic_forward.12} parent=1 // pred_check_branch
      %13 = sbr.rel (0) target = $region9
    $region8: #{actor_critic_forward.12} parent=1 // pred_region
      _
    $region9: #{actor_critic_forward.12} parent=1 // pred_fallthru
      _
    // Predicated region
    $region10: #{actor_critic_forward.12} parent=1 // pred_check
      _
    $region11: #{actor_critic_forward.12} parent=1 // pred_check_branch
      %15 = sbr.rel (0) target = $region13
    $region12: #{actor_critic_forward.12} parent=1 // pred_region
      _
    $region13: #{actor_critic_forward.12} parent=1 // pred_fallthru
      _
    %v17 = vld [vmem:[%s1] sm:$0x1f]
    %v18 = vld [vmem:[%s2] sm:$0xf]
    %v19 = vld [vmem:[%s2 + $0x4] sm:$0xf]
    %v20 = vld [vmem:[%s2 + $0x8] sm:$0xf]
    %v21 = vld [vmem:[%s2 + $0xc] sm:$0xf]
    %v22 = vld [vmem:[%s2 + $0x10] sm:$0xf]
    %v23 = vld [vmem:[%s2 + $0x14] sm:$0xf]
    %v24 = vld [vmem:[%s2 + $0x18] sm:$0xf]
    %v25 = vld [vmem:[%s2 + $0x1c] sm:$0xf]
    %v26 = vld [vmem:[%s2 + $0x20] sm:$0xf]
    %v27 = vld [vmem:[%s2 + $0x24] sm:$0xf]
    %v28 = vld [vmem:[%s2 + $0x28] sm:$0xf]
    %v29 = vld [vmem:[%s2 + $0x2c] sm:$0xf]
    %v30 = vld [vmem:[%s2 + $0x30] sm:$0xf]
    %v31 = vld [vmem:[%s2 + $0x34] sm:$0xf]
    %v32 = vld [vmem:[%s2 + $0x38] sm:$0xf]
    %v33 = vld [vmem:[%s2 + $0x3c] sm:$0xf]
    %v34 = vld [vmem:[%s2 + $0x40] sm:$0xf]
    %v35 = vld [vmem:[%s2 + $0x44] sm:$0xf]
    %v36 = vld [vmem:[%s2 + $0x48] sm:$0xf]
    %v37 = vld [vmem:[%s2 + $0x4c] sm:$0xf]
    %v38 = vld [vmem:[%s2 + $0x50] sm:$0xf]
    %v39 = vld [vmem:[%s2 + $0x54] sm:$0xf]
    %v40 = vld [vmem:[%s2 + $0x58] sm:$0xf]
    %v41 = vld [vmem:[%s2 + $0x5c] sm:$0xf]
    %v42 = vld [vmem:[%s2 + $0x60] sm:$0xf]
    %v43 = vld [vmem:[%s2 + $0x64] sm:$0xf]
    %v44 = vld [vmem:[%s2 + $0x68] sm:$0xf]
    %v45 = vld [vmem:[%s2 + $0x6c] sm:$0xf]
    %v46 = vld [vmem:[%s2 + $0x70] sm:$0xf]
    %v47 = vld [vmem:[%s2 + $0x74] sm:$0xf]
    %v48 = vld [vmem:[%s2 + $0x78] sm:$0xf]
    %v49 = vld [vmem:[%s2 + $0x7c] sm:$0xf]
    %v50 = vld [vmem:[%s2 + $0x80] sm:$0xf]
    %v51 = vld [vmem:[%s2 + $0x84] sm:$0xf]
    %v52 = vld [vmem:[%s2 + $0x88] sm:$0xf]
    %v53 = vld [vmem:[%s2 + $0x8c] sm:$0xf]
    %v54 = vld [vmem:[%s2 + $0x90] sm:$0xf]
    %v55 = vld [vmem:[%s2 + $0x94] sm:$0xf]
    %v56 = vld [vmem:[%s2 + $0x98] sm:$0xf]
    %v57 = vld [vmem:[%s2 + $0x9c] sm:$0xf]
    %v58 = vld [vmem:[%s2 + $0xa0] sm:$0xf]
    %v59 = vld [vmem:[%s2 + $0xa4] sm:$0xf]
    %v60 = vld [vmem:[%s2 + $0xa8] sm:$0xf]
    %v61 = vld [vmem:[%s2 + $0xac] sm:$0xf]
    %v62 = vld [vmem:[%s2 + $0xb0] sm:$0xf]
    %v63 = vld [vmem:[%s2 + $0xb4] sm:$0xf]
    %v64 = vld [vmem:[%s2 + $0xb8] sm:$0xf]
    %v65 = vld [vmem:[%s2 + $0xbc] sm:$0xf]
    %v66 = vld [vmem:[%s2 + $0xc0] sm:$0xf]
    %v67 = vld [vmem:[%s2 + $0xc4] sm:$0xf]
    %v68 = vld [vmem:[%s2 + $0xc8] sm:$0xf]
    %v69 = vld [vmem:[%s2 + $0xcc] sm:$0xf]
    %v70 = vld [vmem:[%s2 + $0xd0] sm:$0xf]
    %v71 = vld [vmem:[%s2 + $0xd4] sm:$0xf]
    %v72 = vld [vmem:[%s2 + $0xd8] sm:$0xf]
    %v73 = vld [vmem:[%s2 + $0xdc] sm:$0xf]
    %v74 = vld [vmem:[%s2 + $0xe0] sm:$0xf]
    %v75 = vld [vmem:[%s2 + $0xe4] sm:$0xf]
    %v76 = vld [vmem:[%s2 + $0xe8] sm:$0xf]
    %v77 = vld [vmem:[%s2 + $0xec] sm:$0xf]
    %v78 = vld [vmem:[%s2 + $0xf0] sm:$0xf]
    %v79 = vld [vmem:[%s2 + $0xf4] sm:$0xf]
    %v80 = vld [vmem:[%s2 + $0xf8] sm:$0xf]
    %v81 = vld [vmem:[%s2 + $0xfc] sm:$0xf]
    %v82 = vld [vmem:[%s2 + $0x100] sm:$0xf]
    %v83 = vld [vmem:[%s2 + $0x104] sm:$0xf]
    %v84 = vld [vmem:[%s2 + $0x108] sm:$0xf]
    %v85 = vld [vmem:[%s2 + $0x10c] sm:$0xf]
    %v86 = vld [vmem:[%s2 + $0x110] sm:$0xf]
    %v87 = vld [vmem:[%s2 + $0x114] sm:$0xf]
    %v88 = vld [vmem:[%s2 + $0x118] sm:$0xf]
    %v89 = vld [vmem:[%s2 + $0x11c] sm:$0xf]
    %v90 = vld [vmem:[%s3] sm:$0x1]
    %v92 = vlaneseq
    %v93 = vshrl.u32 %v92, 7
    %v94 = vsub.s32 0, %v93
    %v95 = vrot.slane %v90, %v94
    %v98 = vcombine.high %v17, %v17
    %v100 = vunpack.c.l.s4 1966171168
    %v101 = vunpack.c.0.s8 %v100
    %v102 = vlaneseq
    %v103 = vshrl.u32 %v102, 7
    %v104 = vsub.s32 %v101, %v103
    %v105 = vrot.slane %v17, %v104
    %v107 = vunpack.c.l.s4 1966171168
    %v108 = vunpack.c.0.s8 %v107
    %v109 = vlaneseq
    %v110 = vshrl.u32 %v109, 7
    %v111 = vsub.s32 %v108, %v110
    %v112 = vrot.slane %v98, %v111
    %v113 = vcombine.high %v105, %v105
    %v115 = vunpack.c.l.s4 1966171168
    %v116 = vunpack.c.0.s8 %v115
    %v117 = vlaneseq
    %v118 = vshrl.u32 %v117, 7
    %v119 = vsub.s32 %v116, %v118
    %v120 = vrot.slane %v105, %v119
    %v122 = vunpack.c.l.s4 1966171168
    %v123 = vunpack.c.0.s8 %v122
    %v124 = vlaneseq
    %v125 = vshrl.u32 %v124, 7
    %v126 = vsub.s32 %v123, %v125
    %v127 = vrot.slane %v112, %v126
    %v129 = vunpack.c.l.s4 1966171168
    %v130 = vunpack.c.0.s8 %v129
    %v131 = vlaneseq
    %v132 = vshrl.u32 %v131, 7
    %v133 = vsub.s32 %v130, %v132
    %v134 = vrot.slane %v113, %v133
    %v135 = vcombine.high %v120, %v120
    %v136 = vcombine.high %v134, %v134
    %v213 = vunpack.c.l.b16 %v18
    %v214 = vunpack.c.l.b16 %v19
    %v215 = vunpack.c.l.b16 %v20
    %v216 = vunpack.c.l.b16 %v21
    %v217 = vunpack.c.l.b16 %v22
    %v218 = vunpack.c.l.b16 %v23
    %v219 = vunpack.c.l.b16 %v24
    %v220 = vunpack.c.l.b16 %v25
    %v221 = vunpack.c.l.b16 %v26
    %v222 = vunpack.c.l.b16 %v27
    %v223 = vunpack.c.l.b16 %v28
    %v224 = vunpack.c.l.b16 %v29
    %v225 = vunpack.c.l.b16 %v30
    %v226 = vunpack.c.l.b16 %v31
    %v227 = vunpack.c.l.b16 %v32
    %v228 = vunpack.c.l.b16 %v33
    %v229 = vunpack.c.l.b16 %v34
    %v230 = vunpack.c.l.b16 %v35
    %v231 = vunpack.c.l.b16 %v36
    %v232 = vunpack.c.l.b16 %v37
    %v233 = vunpack.c.l.b16 %v38
    %v234 = vunpack.c.l.b16 %v39
    %v235 = vunpack.c.l.b16 %v40
    %v236 = vunpack.c.l.b16 %v41
    %v237 = vunpack.c.l.b16 %v42
    %v238 = vunpack.c.l.b16 %v43
    %v239 = vunpack.c.l.b16 %v44
    %v240 = vunpack.c.l.b16 %v45
    %v241 = vunpack.c.l.b16 %v46
    %v242 = vunpack.c.l.b16 %v47
    %v243 = vunpack.c.l.b16 %v48
    %v244 = vunpack.c.l.b16 %v49
    %v245 = vunpack.c.l.b16 %v50
    %v246 = vunpack.c.l.b16 %v51
    %v247 = vunpack.c.l.b16 %v52
    %v248 = vunpack.c.l.b16 %v53
    %v249 = vunpack.c.l.b16 %v54
    %v250 = vunpack.c.l.b16 %v55
    %v251 = vunpack.c.l.b16 %v56
    %v252 = vunpack.c.l.b16 %v57
    %v253 = vunpack.c.l.b16 %v58
    %v254 = vunpack.c.l.b16 %v59
    %v255 = vunpack.c.l.b16 %v60
    %v256 = vunpack.c.l.b16 %v61
    %v257 = vunpack.c.l.b16 %v62
    %v258 = vunpack.c.l.b16 %v63
    %v259 = vunpack.c.l.b16 %v64
    %v260 = vunpack.c.l.b16 %v65
    %v261 = vunpack.c.l.b16 %v66
    %v262 = vunpack.c.l.b16 %v67
    %v263 = vunpack.c.l.b16 %v68
    %v264 = vunpack.c.l.b16 %v69
    %v265 = vunpack.c.l.b16 %v70
    %v266 = vunpack.c.l.b16 %v71
    %v267 = vunpack.c.l.b16 %v72
    %v268 = vunpack.c.l.b16 %v73
    %v269 = vunpack.c.l.b16 %v74
    %v270 = vunpack.c.l.b16 %v75
    %v271 = vunpack.c.l.b16 %v76
    %v272 = vunpack.c.l.b16 %v77
    %v273 = vunpack.c.l.b16 %v78
    %v274 = vunpack.c.l.b16 %v79
    %v275 = vunpack.c.l.b16 %v80
    %v276 = vunpack.c.l.b16 %v81
    %v277 = vunpack.c.l.b16 %v82
    %v278 = vunpack.c.l.b16 %v83
    %v279 = vunpack.c.l.b16 %v84
    %v280 = vunpack.c.l.b16 %v85
    %v281 = vunpack.c.l.b16 %v86
    %v282 = vunpack.c.l.b16 %v87
    %v283 = vunpack.c.l.b16 %v88
    %v284 = vunpack.c.l.b16 %v89
    %v285 = vpack.c.b16 %v214, %v213
    %v286 = vpack.c.b16 %v216, %v215
    %v287 = vpack.c.b16 %v218, %v217
    %v288 = vpack.c.b16 %v220, %v219
    %v289 = vpack.c.b16 %v222, %v221
    %v290 = vpack.c.b16 %v224, %v223
    %v291 = vpack.c.b16 %v226, %v225
    %v292 = vpack.c.b16 %v228, %v227
    %v293 = vpack.c.b16 %v230, %v229
    %v294 = vpack.c.b16 %v232, %v231
    %v295 = vpack.c.b16 %v234, %v233
    %v296 = vpack.c.b16 %v236, %v235
    %v297 = vpack.c.b16 %v238, %v237
    %v298 = vpack.c.b16 %v240, %v239
    %v299 = vpack.c.b16 %v242, %v241
    %v300 = vpack.c.b16 %v244, %v243
    %v301 = vpack.c.b16 %v246, %v245
    %v302 = vpack.c.b16 %v248, %v247
    %v303 = vpack.c.b16 %v250, %v249
    %v304 = vpack.c.b16 %v252, %v251
    %v305 = vpack.c.b16 %v254, %v253
    %v306 = vpack.c.b16 %v256, %v255
    %v307 = vpack.c.b16 %v258, %v257
    %v308 = vpack.c.b16 %v260, %v259
    %v309 = vpack.c.b16 %v262, %v261
    %v310 = vpack.c.b16 %v264, %v263
    %v311 = vpack.c.b16 %v266, %v265
    %v312 = vpack.c.b16 %v268, %v267
    %v313 = vpack.c.b16 %v270, %v269
    %v314 = vpack.c.b16 %v272, %v271
    %v315 = vpack.c.b16 %v274, %v273
    %v316 = vpack.c.b16 %v276, %v275
    %v317 = vpack.c.b16 %v278, %v277
    %v318 = vpack.c.b16 %v280, %v279
    %v319 = vpack.c.b16 %v282, %v281
    %v320 = vpack.c.b16 %v284, %v283
    %vm357 = vcmask 523264
    %v359 = vsel %vm357, %v127, 0
    %361 = vmatprep.subr.bf16.mxu0 0
    %362 = vmatpush1.bf16.msra.mxu0 %v292
    %363 = vmatprep.subr.bf16.mxu0 0
    %364 = vmatpush1.bf16.msra.mxu0 %v291
    %365 = vmatprep.subr.bf16.mxu0 0
    %366 = vmatpush1.bf16.msra.mxu0 %v290
    %367 = vmatprep.subr.bf16.mxu0 0
    %368 = vmatpush1.bf16.msra.mxu0 %v289
    %369 = vmatprep.subr.bf16.mxu0 0
    %370 = vmatpush1.bf16.msra.mxu0 %v288
    %371 = vmatprep.subr.bf16.mxu0 0
    %372 = vmatpush1.bf16.msra.mxu0 %v287
    %373 = vmatprep.subr.bf16.mxu0 0
    %374 = vmatpush1.bf16.msra.mxu0 %v286
    %375 = vmatprep.subr.bf16.mxu0 0
    %376 = vmatpush1.bf16.msra.mxu0 %v285
    %377 = vmatprep.subr.bf16.mxu0 0
    %378 = vmatpush2.bf16.msra.mxu0 %v300
    %379 = vmatprep.subr.bf16.mxu0 0
    %380 = vmatpush2.bf16.msra.mxu0 %v299
    %381 = vmatprep.subr.bf16.mxu0 0
    %382 = vmatpush2.bf16.msra.mxu0 %v298
    %383 = vmatprep.subr.bf16.mxu0 0
    %384 = vmatpush2.bf16.msra.mxu0 %v297
    %385 = vmatprep.subr.bf16.mxu0 0
    %386 = vmatpush2.bf16.msra.mxu0 %v296
    %387 = vmatprep.subr.bf16.mxu0 0
    %388 = vmatpush2.bf16.msra.mxu0 %v295
    %389 = vmatprep.subr.bf16.mxu0 0
    %390 = vmatpush2.bf16.msra.mxu0 %v294
    %391 = vmatprep.subr.bf16.mxu0 0
    %392 = vmatpush2.bf16.msra.mxu0 %v293
    %393 = vmatprep.mubr.bf16.mxu0 %v134
    %394 = vmatmul.mubr.bf16.gmra.mxu0 %v120
    %v395 = vpop.f32.mrf.mxu0
    %v396 = vadd.f32 %v95, %v395
    %v397 = vpop.f32.mrf.mxu0
    %v398 = vpop.f32.mrf.mxu0
    %v399 = vpop.f32.mrf.mxu0
    %400 = vdwg.mxu0
    %401 = vmatprep.subr.bf16.mxu0 0
    %402 = vmatpush1.bf16.msra.mxu0 %v308
    %403 = vmatprep.subr.bf16.mxu0 0
    %404 = vmatpush1.bf16.msra.mxu0 %v307
    %405 = vmatprep.subr.bf16.mxu0 0
    %406 = vmatpush1.bf16.msra.mxu0 %v306
    %407 = vmatprep.subr.bf16.mxu0 0
    %408 = vmatpush1.bf16.msra.mxu0 %v305
    %409 = vmatprep.subr.bf16.mxu0 0
    %410 = vmatpush1.bf16.msra.mxu0 %v304
    %411 = vmatprep.subr.bf16.mxu0 0
    %412 = vmatpush1.bf16.msra.mxu0 %v303
    %413 = vmatprep.subr.bf16.mxu0 0
    %414 = vmatpush1.bf16.msra.mxu0 %v302
    %415 = vmatprep.subr.bf16.mxu0 0
    %416 = vmatpush1.bf16.msra.mxu0 %v301
    %417 = vmatprep.subr.bf16.mxu0 0
    %418 = vmatpush2.bf16.msra.mxu0 %v316
    %419 = vmatprep.subr.bf16.mxu0 0
    %420 = vmatpush2.bf16.msra.mxu0 %v315
    %421 = vmatprep.subr.bf16.mxu0 0
    %422 = vmatpush2.bf16.msra.mxu0 %v314
    %423 = vmatprep.subr.bf16.mxu0 0
    %424 = vmatpush2.bf16.msra.mxu0 %v313
    %425 = vmatprep.subr.bf16.mxu0 0
    %426 = vmatpush2.bf16.msra.mxu0 %v312
    %427 = vmatprep.subr.bf16.mxu0 0
    %428 = vmatpush2.bf16.msra.mxu0 %v311
    %429 = vmatprep.subr.bf16.mxu0 0
    %430 = vmatpush2.bf16.msra.mxu0 %v310
    %431 = vmatprep.subr.bf16.mxu0 0
    %432 = vmatpush2.bf16.msra.mxu0 %v309
    %433 = vmatprep.mubr.bf16.mxu0 %v136
    %434 = vmatmul.mubr.bf16.gmra.mxu0 %v135
    %v435 = vpop.f32.mrf.mxu0
    %v436 = vadd.f32 %v396, %v435
    %v437 = vpop.f32.mrf.mxu0
    %v438 = vpop.f32.mrf.mxu0
    %v439 = vpop.f32.mrf.mxu0
    %440 = vdwg.mxu0
    %441 = vmatprep.subr.bf16.mxu0 0
    %442 = vmatpush1.bf16.msra.mxu0 0
    %443 = vmatprep.subr.bf16.mxu0 0
    %444 = vmatpush1.bf16.msra.mxu0 0
    %445 = vmatprep.subr.bf16.mxu0 0
    %446 = vmatpush1.bf16.msra.mxu0 0
    %447 = vmatprep.subr.bf16.mxu0 0
    %448 = vmatpush1.bf16.msra.mxu0 0
    %449 = vmatprep.subr.bf16.mxu0 0
    %450 = vmatpush1.bf16.msra.mxu0 %v320
    %451 = vmatprep.subr.bf16.mxu0 0
    %452 = vmatpush1.bf16.msra.mxu0 %v319
    %453 = vmatprep.subr.bf16.mxu0 0
    %454 = vmatpush1.bf16.msra.mxu0 %v318
    %455 = vmatprep.subr.bf16.mxu0 0
    %456 = vmatpush1.bf16.msra.mxu0 %v317
    %457 = vmatprep.subr.bf16.mxu0 0
    %458 = vmatpush2.bf16.msra.mxu0 0
    %459 = vmatprep.subr.bf16.mxu0 0
    %460 = vmatpush2.bf16.msra.mxu0 0
    %461 = vmatprep.subr.bf16.mxu0 0
    %462 = vmatpush2.bf16.msra.mxu0 0
    %463 = vmatprep.subr.bf16.mxu0 0
    %464 = vmatpush2.bf16.msra.mxu0 0
    %465 = vmatprep.subr.bf16.mxu0 0
    %466 = vmatpush2.bf16.msra.mxu0 0
    %467 = vmatprep.subr.bf16.mxu0 0
    %468 = vmatpush2.bf16.msra.mxu0 0
    %469 = vmatprep.subr.bf16.mxu0 0
    %470 = vmatpush2.bf16.msra.mxu0 0
    %471 = vmatprep.subr.bf16.mxu0 0
    %472 = vmatpush2.bf16.msra.mxu0 0
    %473 = vmatprep.mubr.bf16.mxu0 0
    %474 = vmatmul.mubr.bf16.gmra.mxu0 %v359
    %v475 = vpop.f32.mrf.mxu0
    %v476 = vadd.f32 %v436, %v475
    %v477 = vpop.f32.mrf.mxu0
    %v478 = vpop.f32.mrf.mxu0
    %v479 = vpop.f32.mrf.mxu0
    %480 = vdwg.mxu0
    %v481 = vmax.f32 %v476, 0.0
    %v482 = vpack.c.bf16 %v481, %v481
    %vm483 = vcmask 516096
    %484 = vst.msk [vmem:[#allocation2] sm:$0x1] %vm483, %v482
    // Predicated region
    $region14: #{actor_critic_forward.12} parent=1 // pred_check
      _
    $region15: #{actor_critic_forward.12} parent=1 // pred_check_branch
      %486 = sbr.rel (0) target = $region17
    $region16: #{actor_critic_forward.12} parent=1 // pred_region
      // Predicated region
      $region18: #{actor_critic_forward.12} parent=16 // pred_check
        _
      $region19: #{actor_critic_forward.12} parent=16 // pred_check_branch
        %488 = sbr.rel (0) target = $region21
      $region20: #{actor_critic_forward.12} parent=16 // pred_region
        // Predicated region
        $region22: #{actor_critic_forward.12} parent=20 // pred_check
          _
        $region23: #{actor_critic_forward.12} parent=20 // pred_check_branch
          %490 = sbr.rel target = $region25
        $region24: #{actor_critic_forward.12} parent=20 // pred_region
          // Predicated region
          $region37: #{actor_critic_forward.12} parent=24 // pred_check
            _
          $region38: #{actor_critic_forward.12} parent=24 // pred_check_branch
            %506 = sbr.rel (0) target = $region40
          $region39: #{actor_critic_forward.12} parent=24 // pred_region
            %s508 = ssub.s32 2, 1
            loop: start=0, step=1, limit=1
            $region41: #{actor_critic_forward.12} parent=39 // loop_pre_header
              _
            $region42: #{actor_critic_forward.12} parent=39 // loop_header
              %s510 = sphi 0, %s514
              %p511 = scmp.ge.s32.totalorder %s510, 1
              %s515 = sphi [#allocation2], [#allocation2]
              %s516 = sphi %s5, %s5
            $region43: #{actor_critic_forward.12} parent=39 // loop_header_branch
              %513 = sbr.rel (%p511) target = $region47
            $region44: #{actor_critic_forward.12} parent=39 // loop_body
              %v517 = vld [vmem:[%s515] sm:%s508]
              %518 = vst [vmem:[%s516] sm:%s508] %v517
            $region45: #{actor_critic_forward.12} parent=39 // loop_footer
              %s514 = sadd.s32 1, %s510
            $region46: #{actor_critic_forward.12} parent=39 // loop_footer_branch
              %509 = sbr.rel target = $region42
            $region47: #{actor_critic_forward.12} parent=39 // loop_exit
              _
          $region40: #{actor_critic_forward.12} parent=24 // pred_fallthru
            _
        $region25: #{actor_critic_forward.12} parent=20 // pred_fallthru
          _
        // Predicated region
        $region26: #{actor_critic_forward.12} parent=20 // pred_check
          _
        $region27: #{actor_critic_forward.12} parent=20 // pred_check_branch
          %492 = sbr.rel (0) target = $region29
        $region28: #{actor_critic_forward.12} parent=20 // pred_region
          %s494 = ssub.s32 2, 1
          loop: start=0, step=1, limit=1
          $region30: #{actor_critic_forward.12} parent=28 // loop_pre_header
            _
          $region31: #{actor_critic_forward.12} parent=28 // loop_header
            %s496 = sphi 0, %s500
            %p497 = scmp.ge.s32.totalorder %s496, 1
            %s501 = sphi [#allocation2], [#allocation2]
            %s502 = sphi %s5, %s5
          $region32: #{actor_critic_forward.12} parent=28 // loop_header_branch
            %499 = sbr.rel (%p497) target = $region36
          $region33: #{actor_critic_forward.12} parent=28 // loop_body
            %v503 = vld [vmem:[%s501] sm:%s494]
            %504 = vst [vmem:[%s502] sm:%s494] %v503
          $region34: #{actor_critic_forward.12} parent=28 // loop_footer
            %s500 = sadd.s32 1, %s496
          $region35: #{actor_critic_forward.12} parent=28 // loop_footer_branch
            %495 = sbr.rel target = $region31
          $region36: #{actor_critic_forward.12} parent=28 // loop_exit
            _
        $region29: #{actor_critic_forward.12} parent=20 // pred_fallthru
          _
      $region21: #{actor_critic_forward.12} parent=16 // pred_fallthru
        _
      %519 = vnop
    $region17: #{actor_critic_forward.12} parent=1 // pred_fallthru
      _
    // Predicated region
    $region48: #{actor_critic_forward.12} parent=1 // pred_check
      _
    $region49: #{actor_critic_forward.12} parent=1 // pred_check_branch
      %521 = sbr.rel (0) target = $region51
    $region50: #{actor_critic_forward.12} parent=1 // pred_region
      _
    $region51: #{actor_critic_forward.12} parent=1 // pred_fallthru
      _

// kernel: actor_critic_forward.10
$region0: #{actor_critic_forward.10}
  #allocation0 [shape = 'u32[]', space=smem, size = 0x4, offset = 0x4, fixed_abs, tag = 'smem constant byte address 0x4 - core index']
  #allocation1 [shape = 'u32[144,128]{1,0:T(1,128)}', space=vmem, size = 0x12000, scoped, tag = 'internal scratch']
  %s0 = inlined_call_operand.vmem [shape: bf16[2,576], index: 0, kind: input, shape index: {}]
  %s1 = inlined_call_operand.vmem [shape: bf16[576,128], index: 1, kind: input, shape index: {}]
  %s2 = inlined_call_operand.vmem [shape: f32[1,128], index: 2, kind: input, shape index: {}]
  %s3 = inlined_call_operand.vmem [shape: bf16[2,128], index: 3, kind: output, shape index: {}]
  %s4 = sld [smem:[#allocation0]]
  $region22: #{actor_critic_forward.10} parent=0
    _
  %s6 = ssub.s32 1, %s4
  %s7 = scalar_select 0, %s6, %s4
  // Predicated region
  $region2: #{actor_critic_forward.10} parent=0 // pred_check
    _
  $region3: #{actor_critic_forward.10} parent=0 // pred_check_branch
    %9 = sbr.rel (0) target = $region5
  $region4: #{actor_critic_forward.10} parent=0 // pred_region
    _
  $region5: #{actor_critic_forward.10} parent=0 // pred_fallthru
    _
  // Predicated region
  $region6: #{actor_critic_forward.10} parent=0 // pred_check
    _
  $region7: #{actor_critic_forward.10} parent=0 // pred_check_branch
    %11 = sbr.rel (0) target = $region9
  $region8: #{actor_critic_forward.10} parent=0 // pred_region
    _
  $region9: #{actor_critic_forward.10} parent=0 // pred_fallthru
    _
  // Predicated region
  $region10: #{actor_critic_forward.10} parent=0 // pred_check
    _
  $region11: #{actor_critic_forward.10} parent=0 // pred_check_branch
    %13 = sbr.rel (0) target = $region13
  $region12: #{actor_critic_forward.10} parent=0 // pred_region
    _
  $region13: #{actor_critic_forward.10} parent=0 // pred_fallthru
    _
  %v15 = vld [vmem:[%s0] sm:$0x1f]
  %v16 = vld [vmem:[%s1] sm:$0xf]
  %v17 = vld [vmem:[%s1 + $0x4] sm:$0xf]
  %v18 = vld [vmem:[%s1 + $0x8] sm:$0xf]
  %v19 = vld [vmem:[%s1 + $0xc] sm:$0xf]
  %v20 = vld [vmem:[%s1 + $0x10] sm:$0xf]
  %v21 = vld [vmem:[%s1 + $0x14] sm:$0xf]
  %v22 = vld [vmem:[%s1 + $0x18] sm:$0xf]
  %v23 = vld [vmem:[%s1 + $0x1c] sm:$0xf]
  %v24 = vld [vmem:[%s1 + $0x20] sm:$0xf]
  %v25 = vld [vmem:[%s1 + $0x24] sm:$0xf]
  %v26 = vld [vmem:[%s1 + $0x28] sm:$0xf]
  %v27 = vld [vmem:[%s1 + $0x2c] sm:$0xf]
  %v28 = vld [vmem:[%s1 + $0x30] sm:$0xf]
  %v29 = vld [vmem:[%s1 + $0x34] sm:$0xf]
  %v30 = vld [vmem:[%s1 + $0x38] sm:$0xf]
  %v31 = vld [vmem:[%s1 + $0x3c] sm:$0xf]
  %v32 = vld [vmem:[%s1 + $0x40] sm:$0xf]
  %v33 = vld [vmem:[%s1 + $0x44] sm:$0xf]
  %v34 = vld [vmem:[%s1 + $0x48] sm:$0xf]
  %v35 = vld [vmem:[%s1 + $0x4c] sm:$0xf]
  %v36 = vld [vmem:[%s1 + $0x50] sm:$0xf]
  %v37 = vld [vmem:[%s1 + $0x54] sm:$0xf]
  %v38 = vld [vmem:[%s1 + $0x58] sm:$0xf]
  %v39 = vld [vmem:[%s1 + $0x5c] sm:$0xf]
  %v40 = vld [vmem:[%s1 + $0x60] sm:$0xf]
  %v41 = vld [vmem:[%s1 + $0x64] sm:$0xf]
  %v42 = vld [vmem:[%s1 + $0x68] sm:$0xf]
  %v43 = vld [vmem:[%s1 + $0x6c] sm:$0xf]
  %v44 = vld [vmem:[%s1 + $0x70] sm:$0xf]
  %v45 = vld [vmem:[%s1 + $0x74] sm:$0xf]
  %v46 = vld [vmem:[%s1 + $0x78] sm:$0xf]
  %v47 = vld [vmem:[%s1 + $0x7c] sm:$0xf]
  %v48 = vld [vmem:[%s1 + $0x80] sm:$0xf]
  %v49 = vld [vmem:[%s1 + $0x84] sm:$0xf]
  %v50 = vld [vmem:[%s1 + $0x88] sm:$0xf]
  %v51 = vld [vmem:[%s1 + $0x8c] sm:$0xf]
  %v52 = vld [vmem:[%s1 + $0x90] sm:$0xf]
  %v53 = vld [vmem:[%s1 + $0x94] sm:$0xf]
  %v54 = vld [vmem:[%s1 + $0x98] sm:$0xf]
  %v55 = vld [vmem:[%s1 + $0x9c] sm:$0xf]
  %v56 = vld [vmem:[%s1 + $0xa0] sm:$0xf]
  %v57 = vld [vmem:[%s1 + $0xa4] sm:$0xf]
  %v58 = vld [vmem:[%s1 + $0xa8] sm:$0xf]
  %v59 = vld [vmem:[%s1 + $0xac] sm:$0xf]
  %v60 = vld [vmem:[%s1 + $0xb0] sm:$0xf]
  %v61 = vld [vmem:[%s1 + $0xb4] sm:$0xf]
  %v62 = vld [vmem:[%s1 + $0xb8] sm:$0xf]
  %v63 = vld [vmem:[%s1 + $0xbc] sm:$0xf]
  %v64 = vld [vmem:[%s1 + $0xc0] sm:$0xf]
  %v65 = vld [vmem:[%s1 + $0xc4] sm:$0xf]
  %v66 = vld [vmem:[%s1 + $0xc8] sm:$0xf]
  %v67 = vld [vmem:[%s1 + $0xcc] sm:$0xf]
  %v68 = vld [vmem:[%s1 + $0xd0] sm:$0xf]
  %v69 = vld [vmem:[%s1 + $0xd4] sm:$0xf]
  %v70 = vld [vmem:[%s1 + $0xd8] sm:$0xf]
  %v71 = vld [vmem:[%s1 + $0xdc] sm:$0xf]
  %v72 = vld [vmem:[%s1 + $0xe0] sm:$0xf]
  %v73 = vld [vmem:[%s1 + $0xe4] sm:$0xf]
  %v74 = vld [vmem:[%s1 + $0xe8] sm:$0xf]
  %v75 = vld [vmem:[%s1 + $0xec] sm:$0xf]
  %v76 = vld [vmem:[%s1 + $0xf0] sm:$0xf]
  %v77 = vld [vmem:[%s1 + $0xf4] sm:$0xf]
  %v78 = vld [vmem:[%s1 + $0xf8] sm:$0xf]
  %v79 = vld [vmem:[%s1 + $0xfc] sm:$0xf]
  %v80 = vld [vmem:[%s1 + $0x100] sm:$0xf]
  %v81 = vld [vmem:[%s1 + $0x104] sm:$0xf]
  %v82 = vld [vmem:[%s1 + $0x108] sm:$0xf]
  %v83 = vld [vmem:[%s1 + $0x10c] sm:$0xf]
  %v84 = vld [vmem:[%s1 + $0x110] sm:$0xf]
  %v85 = vld [vmem:[%s1 + $0x114] sm:$0xf]
  %v86 = vld [vmem:[%s1 + $0x118] sm:$0xf]
  %v87 = vld [vmem:[%s1 + $0x11c] sm:$0xf]
  %v88 = vld [vmem:[%s2] sm:$0x1]
  %v90 = vlaneseq
  %v91 = vshrl.u32 %v90, 7
  %v92 = vsub.s32 0, %v91
  %v93 = vrot.slane %v88, %v92
  %v96 = vcombine.high %v15, %v15
  %v98 = vunpack.c.l.s4 1966171168
  %v99 = vunpack.c.0.s8 %v98
  %v100 = vlaneseq
  %v101 = vshrl.u32 %v100, 7
  %v102 = vsub.s32 %v99, %v101
  %v103 = vrot.slane %v15, %v102
  %v105 = vunpack.c.l.s4 1966171168
  %v106 = vunpack.c.0.s8 %v105
  %v107 = vlaneseq
  %v108 = vshrl.u32 %v107, 7
  %v109 = vsub.s32 %v106, %v108
  %v110 = vrot.slane %v96, %v109
  %v111 = vcombine.high %v103, %v103
  %v113 = vunpack.c.l.s4 1966171168
  %v114 = vunpack.c.0.s8 %v113
  %v115 = vlaneseq
  %v116 = vshrl.u32 %v115, 7
  %v117 = vsub.s32 %v114, %v116
  %v118 = vrot.slane %v103, %v117
  %v120 = vunpack.c.l.s4 1966171168
  %v121 = vunpack.c.0.s8 %v120
  %v122 = vlaneseq
  %v123 = vshrl.u32 %v122, 7
  %v124 = vsub.s32 %v121, %v123
  %v125 = vrot.slane %v110, %v124
  %v127 = vunpack.c.l.s4 1966171168
  %v128 = vunpack.c.0.s8 %v127
  %v129 = vlaneseq
  %v130 = vshrl.u32 %v129, 7
  %v131 = vsub.s32 %v128, %v130
  %v132 = vrot.slane %v111, %v131
  %v133 = vcombine.high %v118, %v118
  %v134 = vcombine.high %v132, %v132
  %v211 = vunpack.c.l.b16 %v16
  %v212 = vunpack.c.l.b16 %v17
  %v213 = vunpack.c.l.b16 %v18
  %v214 = vunpack.c.l.b16 %v19
  %v215 = vunpack.c.l.b16 %v20
  %v216 = vunpack.c.l.b16 %v21
  %v217 = vunpack.c.l.b16 %v22
  %v218 = vunpack.c.l.b16 %v23
  %v219 = vunpack.c.l.b16 %v24
  %v220 = vunpack.c.l.b16 %v25
  %v221 = vunpack.c.l.b16 %v26
  %v222 = vunpack.c.l.b16 %v27
  %v223 = vunpack.c.l.b16 %v28
  %v224 = vunpack.c.l.b16 %v29
  %v225 = vunpack.c.l.b16 %v30
  %v226 = vunpack.c.l.b16 %v31
  %v227 = vunpack.c.l.b16 %v32
  %v228 = vunpack.c.l.b16 %v33
  %v229 = vunpack.c.l.b16 %v34
  %v230 = vunpack.c.l.b16 %v35
  %v231 = vunpack.c.l.b16 %v36
  %v232 = vunpack.c.l.b16 %v37
  %v233 = vunpack.c.l.b16 %v38
  %v234 = vunpack.c.l.b16 %v39
  %v235 = vunpack.c.l.b16 %v40
  %v236 = vunpack.c.l.b16 %v41
  %v237 = vunpack.c.l.b16 %v42
  %v238 = vunpack.c.l.b16 %v43
  %v239 = vunpack.c.l.b16 %v44
  %v240 = vunpack.c.l.b16 %v45
  %v241 = vunpack.c.l.b16 %v46
  %v242 = vunpack.c.l.b16 %v47
  %v243 = vunpack.c.l.b16 %v48
  %v244 = vunpack.c.l.b16 %v49
  %v245 = vunpack.c.l.b16 %v50
  %v246 = vunpack.c.l.b16 %v51
  %v247 = vunpack.c.l.b16 %v52
  %v248 = vunpack.c.l.b16 %v53
  %v249 = vunpack.c.l.b16 %v54
  %v250 = vunpack.c.l.b16 %v55
  %v251 = vunpack.c.l.b16 %v56
  %v252 = vunpack.c.l.b16 %v57
  %v253 = vunpack.c.l.b16 %v58
  %v254 = vunpack.c.l.b16 %v59
  %v255 = vunpack.c.l.b16 %v60
  %v256 = vunpack.c.l.b16 %v61
  %v257 = vunpack.c.l.b16 %v62
  %v258 = vunpack.c.l.b16 %v63
  %v259 = vunpack.c.l.b16 %v64
  %v260 = vunpack.c.l.b16 %v65
  %v261 = vunpack.c.l.b16 %v66
  %v262 = vunpack.c.l.b16 %v67
  %v263 = vunpack.c.l.b16 %v68
  %v264 = vunpack.c.l.b16 %v69
  %v265 = vunpack.c.l.b16 %v70
  %v266 = vunpack.c.l.b16 %v71
  %v267 = vunpack.c.l.b16 %v72
  %v268 = vunpack.c.l.b16 %v73
  %v269 = vunpack.c.l.b16 %v74
  %v270 = vunpack.c.l.b16 %v75
  %v271 = vunpack.c.l.b16 %v76
  %v272 = vunpack.c.l.b16 %v77
  %v273 = vunpack.c.l.b16 %v78
  %v274 = vunpack.c.l.b16 %v79
  %v275 = vunpack.c.l.b16 %v80
  %v276 = vunpack.c.l.b16 %v81
  %v277 = vunpack.c.l.b16 %v82
  %v278 = vunpack.c.l.b16 %v83
  %v279 = vunpack.c.l.b16 %v84
  %v280 = vunpack.c.l.b16 %v85
  %v281 = vunpack.c.l.b16 %v86
  %v282 = vunpack.c.l.b16 %v87
  %v283 = vpack.c.b16 %v212, %v211
  %v284 = vpack.c.b16 %v214, %v213
  %v285 = vpack.c.b16 %v216, %v215
  %v286 = vpack.c.b16 %v218, %v217
  %v287 = vpack.c.b16 %v220, %v219
  %v288 = vpack.c.b16 %v222, %v221
  %v289 = vpack.c.b16 %v224, %v223
  %v290 = vpack.c.b16 %v226, %v225
  %v291 = vpack.c.b16 %v228, %v227
  %v292 = vpack.c.b16 %v230, %v229
  %v293 = vpack.c.b16 %v232, %v231
  %v294 = vpack.c.b16 %v234, %v233
  %v295 = vpack.c.b16 %v236, %v235
  %v296 = vpack.c.b16 %v238, %v237
  %v297 = vpack.c.b16 %v240, %v239
  %v298 = vpack.c.b16 %v242, %v241
  %v299 = vpack.c.b16 %v244, %v243
  %v300 = vpack.c.b16 %v246, %v245
  %v301 = vpack.c.b16 %v248, %v247
  %v302 = vpack.c.b16 %v250, %v249
  %v303 = vpack.c.b16 %v252, %v251
  %v304 = vpack.c.b16 %v254, %v253
  %v305 = vpack.c.b16 %v256, %v255
  %v306 = vpack.c.b16 %v258, %v257
  %v307 = vpack.c.b16 %v260, %v259
  %v308 = vpack.c.b16 %v262, %v261
  %v309 = vpack.c.b16 %v264, %v263
  %v310 = vpack.c.b16 %v266, %v265
  %v311 = vpack.c.b16 %v268, %v267
  %v312 = vpack.c.b16 %v270, %v269
  %v313 = vpack.c.b16 %v272, %v271
  %v314 = vpack.c.b16 %v274, %v273
  %v315 = vpack.c.b16 %v276, %v275
  %v316 = vpack.c.b16 %v278, %v277
  %v317 = vpack.c.b16 %v280, %v279
  %v318 = vpack.c.b16 %v282, %v281
  %vm355 = vcmask 523264
  %v357 = vsel %vm355, %v125, 0
  %359 = vmatprep.subr.bf16.mxu0 0
  %360 = vmatpush1.bf16.msra.mxu0 %v290
  %361 = vmatprep.subr.bf16.mxu0 0
  %362 = vmatpush1.bf16.msra.mxu0 %v289
  %363 = vmatprep.subr.bf16.mxu0 0
  %364 = vmatpush1.bf16.msra.mxu0 %v288
  %365 = vmatprep.subr.bf16.mxu0 0
  %366 = vmatpush1.bf16.msra.mxu0 %v287
  %367 = vmatprep.subr.bf16.mxu0 0
  %368 = vmatpush1.bf16.msra.mxu0 %v286
  %369 = vmatprep.subr.bf16.mxu0 0
  %370 = vmatpush1.bf16.msra.mxu0 %v285
  %371 = vmatprep.subr.bf16.mxu0 0
  %372 = vmatpush1.bf16.msra.mxu0 %v284
  %373 = vmatprep.subr.bf16.mxu0 0
  %374 = vmatpush1.bf16.msra.mxu0 %v283
  %375 = vmatprep.subr.bf16.mxu0 0
  %376 = vmatpush2.bf16.msra.mxu0 %v298
  %377 = vmatprep.subr.bf16.mxu0 0
  %378 = vmatpush2.bf16.msra.mxu0 %v297
  %379 = vmatprep.subr.bf16.mxu0 0
  %380 = vmatpush2.bf16.msra.mxu0 %v296
  %381 = vmatprep.subr.bf16.mxu0 0
  %382 = vmatpush2.bf16.msra.mxu0 %v295
  %383 = vmatprep.subr.bf16.mxu0 0
  %384 = vmatpush2.bf16.msra.mxu0 %v294
  %385 = vmatprep.subr.bf16.mxu0 0
  %386 = vmatpush2.bf16.msra.mxu0 %v293
  %387 = vmatprep.subr.bf16.mxu0 0
  %388 = vmatpush2.bf16.msra.mxu0 %v292
  %389 = vmatprep.subr.bf16.mxu0 0
  %390 = vmatpush2.bf16.msra.mxu0 %v291
  %391 = vmatprep.mubr.bf16.mxu0 %v132
  %392 = vmatmul.mubr.bf16.gmra.mxu0 %v118
  %v393 = vpop.f32.mrf.mxu0
  %v394 = vadd.f32 %v93, %v393
  %v395 = vpop.f32.mrf.mxu0
  %v396 = vpop.f32.mrf.mxu0
  %v397 = vpop.f32.mrf.mxu0
  %398 = vdwg.mxu0
  %399 = vmatprep.subr.bf16.mxu0 0
  %400 = vmatpush1.bf16.msra.mxu0 %v306
  %401 = vmatprep.subr.bf16.mxu0 0
  %402 = vmatpush1.bf16.msra.mxu0 %v305
  %403 = vmatprep.subr.bf16.mxu0 0
  %404 = vmatpush1.bf16.msra.mxu0 %v304
  %405 = vmatprep.subr.bf16.mxu0 0
  %406 = vmatpush1.bf16.msra.mxu0 %v303
  %407 = vmatprep.subr.bf16.mxu0 0
  %408 = vmatpush1.bf16.msra.mxu0 %v302
  %409 = vmatprep.subr.bf16.mxu0 0
  %410 = vmatpush1.bf16.msra.mxu0 %v301
  %411 = vmatprep.subr.bf16.mxu0 0
  %412 = vmatpush1.bf16.msra.mxu0 %v300
  %413 = vmatprep.subr.bf16.mxu0 0
  %414 = vmatpush1.bf16.msra.mxu0 %v299
  %415 = vmatprep.subr.bf16.mxu0 0
  %416 = vmatpush2.bf16.msra.mxu0 %v314
  %417 = vmatprep.subr.bf16.mxu0 0
  %418 = vmatpush2.bf16.msra.mxu0 %v313
  %419 = vmatprep.subr.bf16.mxu0 0
  %420 = vmatpush2.bf16.msra.mxu0 %v312
  %421 = vmatprep.subr.bf16.mxu0 0
  %422 = vmatpush2.bf16.msra.mxu0 %v311
  %423 = vmatprep.subr.bf16.mxu0 0
  %424 = vmatpush2.bf16.msra.mxu0 %v310
  %425 = vmatprep.subr.bf16.mxu0 0
  %426 = vmatpush2.bf16.msra.mxu0 %v309
  %427 = vmatprep.subr.bf16.mxu0 0
  %428 = vmatpush2.bf16.msra.mxu0 %v308
  %429 = vmatprep.subr.bf16.mxu0 0
  %430 = vmatpush2.bf16.msra.mxu0 %v307
  %431 = vmatprep.mubr.bf16.mxu0 %v134
  %432 = vmatmul.mubr.bf16.gmra.mxu0 %v133
  %v433 = vpop.f32.mrf.mxu0
  %v434 = vadd.f32 %v394, %v433
  %v435 = vpop.f32.mrf.mxu0
  %v436 = vpop.f32.mrf.mxu0
  %v437 = vpop.f32.mrf.mxu0
  %438 = vdwg.mxu0
  %439 = vmatprep.subr.bf16.mxu0 0
  %440 = vmatpush1.bf16.msra.mxu0 0
  %441 = vmatprep.subr.bf16.mxu0 0
  %442 = vmatpush1.bf16.msra.mxu0 0
  %443 = vmatprep.subr.bf16.mxu0 0
  %444 = vmatpush1.bf16.msra.mxu0 0
  %445 = vmatprep.subr.bf16.mxu0 0
  %446 = vmatpush1.bf16.msra.mxu0 0
  %447 = vmatprep.subr.bf16.mxu0 0
  %448 = vmatpush1.bf16.msra.mxu0 %v318
  %449 = vmatprep.subr.bf16.mxu0 0
  %450 = vmatpush1.bf16.msra.mxu0 %v317
  %451 = vmatprep.subr.bf16.mxu0 0
  %452 = vmatpush1.bf16.msra.mxu0 %v316
  %453 = vmatprep.subr.bf16.mxu0 0
  %454 = vmatpush1.bf16.msra.mxu0 %v315
  %455 = vmatprep.subr.bf16.mxu0 0
  %456 = vmatpush2.bf16.msra.mxu0 0
  %457 = vmatprep.subr.bf16.mxu0 0
  %458 = vmatpush2.bf16.msra.mxu0 0
  %459 = vmatprep.subr.bf16.mxu0 0
  %460 = vmatpush2.bf16.msra.mxu0 0
  %461 = vmatprep.subr.bf16.mxu0 0
  %462 = vmatpush2.bf16.msra.mxu0 0
  %463 = vmatprep.subr.bf16.mxu0 0
  %464 = vmatpush2.bf16.msra.mxu0 0
  %465 = vmatprep.subr.bf16.mxu0 0
  %466 = vmatpush2.bf16.msra.mxu0 0
  %467 = vmatprep.subr.bf16.mxu0 0
  %468 = vmatpush2.bf16.msra.mxu0 0
  %469 = vmatprep.subr.bf16.mxu0 0
  %470 = vmatpush2.bf16.msra.mxu0 0
  %471 = vmatprep.mubr.bf16.mxu0 0
  %472 = vmatmul.mubr.bf16.gmra.mxu0 %v357
  %v473 = vpop.f32.mrf.mxu0
  %v474 = vadd.f32 %v434, %v473
  %v475 = vpop.f32.mrf.mxu0
  %v476 = vpop.f32.mrf.mxu0
  %v477 = vpop.f32.mrf.mxu0
  %478 = vdwg.mxu0
  %v479 = vmax.f32 %v474, 0.0
  %v480 = vpack.c.bf16 %v479, %v479
  %481 = vst [vmem:[%s3] sm:$0x1] %v480
  // Predicated region
  $region14: #{actor_critic_forward.10} parent=0 // pred_check
    _
  $region15: #{actor_critic_forward.10} parent=0 // pred_check_branch
    %483 = sbr.rel (0) target = $region17
  $region16: #{actor_critic_forward.10} parent=0 // pred_region
    _
  $region17: #{actor_critic_forward.10} parent=0 // pred_fallthru
    _
  // Predicated region
  $region18: #{actor_critic_forward.10} parent=0 // pred_check
    _
  $region19: #{actor_critic_forward.10} parent=0 // pred_check_branch
    %485 = sbr.rel (0) target = $region21
  $region20: #{actor_critic_forward.10} parent=0 // pred_region
    _
  $region21: #{actor_critic_forward.10} parent=0 // pred_fallthru
    _

// kernel: actor_critic_forward.11
$region0: #{actor_critic_forward.11}
  #allocation0 [shape = 'u32[]', space=smem, size = 0x4, offset = 0x4, fixed_abs, tag = 'smem constant byte address 0x4 - core index']
  #allocation1 [shape = 'u32[144,128]{1,0:T(1,128)}', space=vmem, size = 0x12000, scoped, tag = 'internal scratch']
  %s0 = inlined_call_operand.vmem [shape: bf16[2,128], index: 0, kind: input, shape index: {}]
  %s1 = inlined_call_operand.vmem [shape: bf16[128,512], index: 1, kind: input, shape index: {}]
  %s2 = inlined_call_operand.vmem [shape: f32[1,512], index: 2, kind: input, shape index: {}]
  %s3 = inlined_call_operand.vmem [shape: bf16[512,128], index: 3, kind: input, shape index: {}]
  %s4 = inlined_call_operand.vmem [shape: f32[1,128], index: 4, kind: input, shape index: {}]
  %s5 = inlined_call_operand.vmem [shape: f32[2,128], index: 5, kind: output, shape index: {}]
  %s6 = sld [smem:[#allocation0]]
  $region30: #{actor_critic_forward.11} parent=0
    _
  %s8 = ssub.s32 1, %s6
  %s9 = scalar_select 0, %s8, %s6
  // Predicated region
  $region2: #{actor_critic_forward.11} parent=0 // pred_check
    _
  $region3: #{actor_critic_forward.11} parent=0 // pred_check_branch
    %11 = sbr.rel (0) target = $region5
  $region4: #{actor_critic_forward.11} parent=0 // pred_region
    _
  $region5: #{actor_critic_forward.11} parent=0 // pred_fallthru
    _
  // Predicated region
  $region6: #{actor_critic_forward.11} parent=0 // pred_check
    _
  $region7: #{actor_critic_forward.11} parent=0 // pred_check_branch
    %13 = sbr.rel (0) target = $region9
  $region8: #{actor_critic_forward.11} parent=0 // pred_region
    _
  $region9: #{actor_critic_forward.11} parent=0 // pred_fallthru
    _
  // Predicated region
  $region10: #{actor_critic_forward.11} parent=0 // pred_check
    _
  $region11: #{actor_critic_forward.11} parent=0 // pred_check_branch
    %15 = sbr.rel (0) target = $region13
  $region12: #{actor_critic_forward.11} parent=0 // pred_region
    _
  $region13: #{actor_critic_forward.11} parent=0 // pred_fallthru
    _
  // Predicated region
  $region14: #{actor_critic_forward.11} parent=0 // pred_check
    _
  $region15: #{actor_critic_forward.11} parent=0 // pred_check_branch
    %17 = sbr.rel (0) target = $region17
  $region16: #{actor_critic_forward.11} parent=0 // pred_region
    _
  $region17: #{actor_critic_forward.11} parent=0 // pred_fallthru
    _
  // Predicated region
  $region18: #{actor_critic_forward.11} parent=0 // pred_check
    _
  $region19: #{actor_critic_forward.11} parent=0 // pred_check_branch
    %19 = sbr.rel (0) target = $region21
  $region20: #{actor_critic_forward.11} parent=0 // pred_region
    _
  $region21: #{actor_critic_forward.11} parent=0 // pred_fallthru
    _
  %v21 = vld [vmem:[%s0] sm:$0x1]
  %v22 = vld [vmem:[%s1] sm:$0xff]
  %v23 = vld [vmem:[%s1 + $0x8] sm:$0xff]
  %v24 = vld [vmem:[%s1 + $0x10] sm:$0xff]
  %v25 = vld [vmem:[%s1 + $0x18] sm:$0xff]
  %v26 = vld [vmem:[%s1 + $0x20] sm:$0xff]
  %v27 = vld [vmem:[%s1 + $0x28] sm:$0xff]
  %v28 = vld [vmem:[%s1 + $0x30] sm:$0xff]
  %v29 = vld [vmem:[%s1 + $0x38] sm:$0xff]
  %v30 = vld [vmem:[%s1 + $0x40] sm:$0xff]
  %v31 = vld [vmem:[%s1 + $0x48] sm:$0xff]
  %v32 = vld [vmem:[%s1 + $0x50] sm:$0xff]
  %v33 = vld [vmem:[%s1 + $0x58] sm:$0xff]
  %v34 = vld [vmem:[%s1 + $0x60] sm:$0xff]
  %v35 = vld [vmem:[%s1 + $0x68] sm:$0xff]
  %v36 = vld [vmem:[%s1 + $0x70] sm:$0xff]
  %v37 = vld [vmem:[%s1 + $0x78] sm:$0xff]
  %v38 = vld [vmem:[%s1 + $0x80] sm:$0xff]
  %v39 = vld [vmem:[%s1 + $0x88] sm:$0xff]
  %v40 = vld [vmem:[%s1 + $0x90] sm:$0xff]
  %v41 = vld [vmem:[%s1 + $0x98] sm:$0xff]
  %v42 = vld [vmem:[%s1 + $0xa0] sm:$0xff]
  %v43 = vld [vmem:[%s1 + $0xa8] sm:$0xff]
  %v44 = vld [vmem:[%s1 + $0xb0] sm:$0xff]
  %v45 = vld [vmem:[%s1 + $0xb8] sm:$0xff]
  %v46 = vld [vmem:[%s1 + $0xc0] sm:$0xff]
  %v47 = vld [vmem:[%s1 + $0xc8] sm:$0xff]
  %v48 = vld [vmem:[%s1 + $0xd0] sm:$0xff]
  %v49 = vld [vmem:[%s1 + $0xd8] sm:$0xff]
  %v50 = vld [vmem:[%s1 + $0xe0] sm:$0xff]
  %v51 = vld [vmem:[%s1 + $0xe8] sm:$0xff]
  %v52 = vld [vmem:[%s1 + $0xf0] sm:$0xff]
  %v53 = vld [vmem:[%s1 + $0xf8] sm:$0xff]
  %v54 = vld [vmem:[%s2] sm:$0xf]
  %v56 = vlaneseq
  %v57 = vshrl.u32 %v56, 7
  %v58 = vsub.s32 0, %v57
  %v59 = vrot.slane %v54, %v58
  %v60 = vlaneseq
  %v61 = vshrl.u32 %v60, 7
  %v62 = vsub.s32 1, %v61
  %v63 = vrot.slane %v54, %v62
  %v64 = vlaneseq
  %v65 = vshrl.u32 %v64, 7
  %v66 = vsub.s32 2, %v65
  %v67 = vrot.slane %v54, %v66
  %v68 = vlaneseq
  %v69 = vshrl.u32 %v68, 7
  %v70 = vsub.s32 3, %v69
  %v71 = vrot.slane %v54, %v70
  %v108 = vunpack.c.l.b16 %v22
  %v109 = vunpack.c.h.b16 %v22
  %v110 = vunpack.c.l.b16 %v23
  %v111 = vunpack.c.h.b16 %v23
  %v112 = vunpack.c.l.b16 %v24
  %v113 = vunpack.c.h.b16 %v24
  %v114 = vunpack.c.l.b16 %v25
  %v115 = vunpack.c.h.b16 %v25
  %v116 = vunpack.c.l.b16 %v26
  %v117 = vunpack.c.h.b16 %v26
  %v118 = vunpack.c.l.b16 %v27
  %v119 = vunpack.c.h.b16 %v27
  %v120 = vunpack.c.l.b16 %v28
  %v121 = vunpack.c.h.b16 %v28
  %v122 = vunpack.c.l.b16 %v29
  %v123 = vunpack.c.h.b16 %v29
  %v124 = vunpack.c.l.b16 %v30
  %v125 = vunpack.c.h.b16 %v30
  %v126 = vunpack.c.l.b16 %v31
  %v127 = vunpack.c.h.b16 %v31
  %v128 = vunpack.c.l.b16 %v32
  %v129 = vunpack.c.h.b16 %v32
  %v130 = vunpack.c.l.b16 %v33
  %v131 = vunpack.c.h.b16 %v33
  %v132 = vunpack.c.l.b16 %v34
  %v133 = vunpack.c.h.b16 %v34
  %v134 = vunpack.c.l.b16 %v35
  %v135 = vunpack.c.h.b16 %v35
  %v136 = vunpack.c.l.b16 %v36
  %v137 = vunpack.c.h.b16 %v36
  %v138 = vunpack.c.l.b16 %v37
  %v139 = vunpack.c.h.b16 %v37
  %v140 = vunpack.c.l.b16 %v38
  %v141 = vunpack.c.h.b16 %v38
  %v142 = vunpack.c.l.b16 %v39
  %v143 = vunpack.c.h.b16 %v39
  %v144 = vunpack.c.l.b16 %v40
  %v145 = vunpack.c.h.b16 %v40
  %v146 = vunpack.c.l.b16 %v41
  %v147 = vunpack.c.h.b16 %v41
  %v148 = vunpack.c.l.b16 %v42
  %v149 = vunpack.c.h.b16 %v42
  %v150 = vunpack.c.l.b16 %v43
  %v151 = vunpack.c.h.b16 %v43
  %v152 = vunpack.c.l.b16 %v44
  %v153 = vunpack.c.h.b16 %v44
  %v154 = vunpack.c.l.b16 %v45
  %v155 = vunpack.c.h.b16 %v45
  %v156 = vunpack.c.l.b16 %v46
  %v157 = vunpack.c.h.b16 %v46
  %v158 = vunpack.c.l.b16 %v47
  %v159 = vunpack.c.h.b16 %v47
  %v160 = vunpack.c.l.b16 %v48
  %v161 = vunpack.c.h.b16 %v48
  %v162 = vunpack.c.l.b16 %v49
  %v163 = vunpack.c.h.b16 %v49
  %v164 = vunpack.c.l.b16 %v50
  %v165 = vunpack.c.h.b16 %v50
  %v166 = vunpack.c.l.b16 %v51
  %v167 = vunpack.c.h.b16 %v51
  %v168 = vunpack.c.l.b16 %v52
  %v169 = vunpack.c.h.b16 %v52
  %v170 = vunpack.c.l.b16 %v53
  %v171 = vunpack.c.h.b16 %v53
  %v172 = vpack.c.b16 %v112, %v108
  %v173 = vpack.c.b16 %v113, %v109
  %v174 = vpack.c.b16 %v114, %v110
  %v175 = vpack.c.b16 %v115, %v111
  %v176 = vpack.c.b16 %v120, %v116
  %v177 = vpack.c.b16 %v121, %v117
  %v178 = vpack.c.b16 %v122, %v118
  %v179 = vpack.c.b16 %v123, %v119
  %v180 = vpack.c.b16 %v128, %v124
  %v181 = vpack.c.b16 %v129, %v125
  %v182 = vpack.c.b16 %v130, %v126
  %v183 = vpack.c.b16 %v131, %v127
  %v184 = vpack.c.b16 %v136, %v132
  %v185 = vpack.c.b16 %v137, %v133
  %v186 = vpack.c.b16 %v138, %v134
  %v187 = vpack.c.b16 %v139, %v135
  %v188 = vpack.c.b16 %v144, %v140
  %v189 = vpack.c.b16 %v145, %v141
  %v190 = vpack.c.b16 %v146, %v142
  %v191 = vpack.c.b16 %v147, %v143
  %v192 = vpack.c.b16 %v152, %v148
  %v193 = vpack.c.b16 %v153, %v149
  %v194 = vpack.c.b16 %v154, %v150
  %v195 = vpack.c.b16 %v155, %v151
  %v196 = vpack.c.b16 %v160, %v156
  %v197 = vpack.c.b16 %v161, %v157
  %v198 = vpack.c.b16 %v162, %v158
  %v199 = vpack.c.b16 %v163, %v159
  %v200 = vpack.c.b16 %v168, %v164
  %v201 = vpack.c.b16 %v169, %v165
  %v202 = vpack.c.b16 %v170, %v166
  %v203 = vpack.c.b16 %v171, %v167
  %236 = vmatprep.subr.bf16.mxu0 %v201
  %237 = vmatpush1.bf16.msra.mxu0 %v200
  %238 = vmatprep.subr.bf16.mxu0 %v197
  %239 = vmatpush1.bf16.msra.mxu0 %v196
  %240 = vmatprep.subr.bf16.mxu0 %v193
  %241 = vmatpush1.bf16.msra.mxu0 %v192
  %242 = vmatprep.subr.bf16.mxu0 %v189
  %243 = vmatpush1.bf16.msra.mxu0 %v188
  %244 = vmatprep.subr.bf16.mxu0 %v185
  %245 = vmatpush1.bf16.msra.mxu0 %v184
  %246 = vmatprep.subr.bf16.mxu0 %v181
  %247 = vmatpush1.bf16.msra.mxu0 %v180
  %248 = vmatprep.subr.bf16.mxu0 %v177
  %249 = vmatpush1.bf16.msra.mxu0 %v176
  %250 = vmatprep.subr.bf16.mxu0 %v173
  %251 = vmatpush1.bf16.msra.mxu0 %v172
  %252 = vmatprep.subr.bf16.mxu0 0
  %253 = vmatpush2.bf16.msra.mxu0 0
  %254 = vmatprep.subr.bf16.mxu0 0
  %255 = vmatpush2.bf16.msra.mxu0 0
  %256 = vmatprep.subr.bf16.mxu0 0
  %257 = vmatpush2.bf16.msra.mxu0 0
  %258 = vmatprep.subr.bf16.mxu0 0
  %259 = vmatpush2.bf16.msra.mxu0 0
  %260 = vmatprep.subr.bf16.mxu0 0
  %261 = vmatpush2.bf16.msra.mxu0 0
  %262 = vmatprep.subr.bf16.mxu0 0
  %263 = vmatpush2.bf16.msra.mxu0 0
  %264 = vmatprep.subr.bf16.mxu0 0
  %265 = vmatpush2.bf16.msra.mxu0 0
  %266 = vmatprep.subr.bf16.mxu0 0
  %267 = vmatpush2.bf16.msra.mxu0 0
  %268 = vmatprep.mubr.bf16.mxu0 0
  %269 = vmatmul.mubr.bf16.gmra.mxu0 %v21
  %v270 = vpop.f32.mrf.mxu0
  %v271 = vadd.f32 %v59, %v270
  %v272 = vpop.f32.mrf.mxu0
  %v273 = vadd.f32 %v63, %v272
  %v274 = vpop.f32.mrf.mxu0
  %v275 = vpop.f32.mrf.mxu0
  %276 = vdwg.mxu0
  %277 = vmatprep.subr.bf16.mxu0 %v203
  %278 = vmatpush1.bf16.msra.mxu0 %v202
  %279 = vmatprep.subr.bf16.mxu0 %v199
  %280 = vmatpush1.bf16.msra.mxu0 %v198
  %281 = vmatprep.subr.bf16.mxu0 %v195
  %282 = vmatpush1.bf16.msra.mxu0 %v194
  %283 = vmatprep.subr.bf16.mxu0 %v191
  %284 = vmatpush1.bf16.msra.mxu0 %v190
  %285 = vmatprep.subr.bf16.mxu0 %v187
  %286 = vmatpush1.bf16.msra.mxu0 %v186
  %287 = vmatprep.subr.bf16.mxu0 %v183
  %288 = vmatpush1.bf16.msra.mxu0 %v182
  %289 = vmatprep.subr.bf16.mxu0 %v179
  %290 = vmatpush1.bf16.msra.mxu0 %v178
  %291 = vmatprep.subr.bf16.mxu0 %v175
  %292 = vmatpush1.bf16.msra.mxu0 %v174
  %293 = vmatprep.subr.bf16.mxu0 0
  %294 = vmatpush2.bf16.msra.mxu0 0
  %295 = vmatprep.subr.bf16.mxu0 0
  %296 = vmatpush2.bf16.msra.mxu0 0
  %297 = vmatprep.subr.bf16.mxu0 0
  %298 = vmatpush2.bf16.msra.mxu0 0
  %299 = vmatprep.subr.bf16.mxu0 0
  %300 = vmatpush2.bf16.msra.mxu0 0
  %301 = vmatprep.subr.bf16.mxu0 0
  %302 = vmatpush2.bf16.msra.mxu0 0
  %303 = vmatprep.subr.bf16.mxu0 0
  %304 = vmatpush2.bf16.msra.mxu0 0
  %305 = vmatprep.subr.bf16.mxu0 0
  %306 = vmatpush2.bf16.msra.mxu0 0
  %307 = vmatprep.subr.bf16.mxu0 0
  %308 = vmatpush2.bf16.msra.mxu0 0
  %309 = vmatprep.mubr.bf16.mxu0 0
  %310 = vmatmul.mubr.bf16.gmra.mxu0 %v21
  %v311 = vpop.f32.mrf.mxu0
  %v312 = vadd.f32 %v67, %v311
  %v313 = vpop.f32.mrf.mxu0
  %v314 = vadd.f32 %v71, %v313
  %v315 = vpop.f32.mrf.mxu0
  %v316 = vpop.f32.mrf.mxu0
  %317 = vdwg.mxu0
  %v318 = vmax.f32 %v271, 0.0
  %v319 = vmax.f32 %v273, 0.0
  %v320 = vmax.f32 %v312, 0.0
  %v321 = vmax.f32 %v314, 0.0
  %v322 = vpack.c.bf16 %v318, %v318
  %v323 = vpack.c.bf16 %v319, %v319
  %v324 = vpack.c.bf16 %v320, %v320
  %v325 = vpack.c.bf16 %v321, %v321
  %v326 = vld [vmem:[%s3] sm:$0xf]
  %v327 = vld [vmem:[%s3 + $0x4] sm:$0xf]
  %v328 = vld [vmem:[%s3 + $0x8] sm:$0xf]
  %v329 = vld [vmem:[%s3 + $0xc] sm:$0xf]
  %v330 = vld [vmem:[%s3 + $0x10] sm:$0xf]
  %v331 = vld [vmem:[%s3 + $0x14] sm:$0xf]
  %v332 = vld [vmem:[%s3 + $0x18] sm:$0xf]
  %v333 = vld [vmem:[%s3 + $0x1c] sm:$0xf]
  %v334 = vld [vmem:[%s3 + $0x20] sm:$0xf]
  %v335 = vld [vmem:[%s3 + $0x24] sm:$0xf]
  %v336 = vld [vmem:[%s3 + $0x28] sm:$0xf]
  %v337 = vld [vmem:[%s3 + $0x2c] sm:$0xf]
  %v338 = vld [vmem:[%s3 + $0x30] sm:$0xf]
  %v339 = vld [vmem:[%s3 + $0x34] sm:$0xf]
  %v340 = vld [vmem:[%s3 + $0x38] sm:$0xf]
  %v341 = vld [vmem:[%s3 + $0x3c] sm:$0xf]
  %v342 = vld [vmem:[%s3 + $0x40] sm:$0xf]
  %v343 = vld [vmem:[%s3 + $0x44] sm:$0xf]
  %v344 = vld [vmem:[%s3 + $0x48] sm:$0xf]
  %v345 = vld [vmem:[%s3 + $0x4c] sm:$0xf]
  %v346 = vld [vmem:[%s3 + $0x50] sm:$0xf]
  %v347 = vld [vmem:[%s3 + $0x54] sm:$0xf]
  %v348 = vld [vmem:[%s3 + $0x58] sm:$0xf]
  %v349 = vld [vmem:[%s3 + $0x5c] sm:$0xf]
  %v350 = vld [vmem:[%s3 + $0x60] sm:$0xf]
  %v351 = vld [vmem:[%s3 + $0x64] sm:$0xf]
  %v352 = vld [vmem:[%s3 + $0x68] sm:$0xf]
  %v353 = vld [vmem:[%s3 + $0x6c] sm:$0xf]
  %v354 = vld [vmem:[%s3 + $0x70] sm:$0xf]
  %v355 = vld [vmem:[%s3 + $0x74] sm:$0xf]
  %v356 = vld [vmem:[%s3 + $0x78] sm:$0xf]
  %v357 = vld [vmem:[%s3 + $0x7c] sm:$0xf]
  %v358 = vld [vmem:[%s3 + $0x80] sm:$0xf]
  %v359 = vld [vmem:[%s3 + $0x84] sm:$0xf]
  %v360 = vld [vmem:[%s3 + $0x88] sm:$0xf]
  %v361 = vld [vmem:[%s3 + $0x8c] sm:$0xf]
  %v362 = vld [vmem:[%s3 + $0x90] sm:$0xf]
  %v363 = vld [vmem:[%s3 + $0x94] sm:$0xf]
  %v364 = vld [vmem:[%s3 + $0x98] sm:$0xf]
  %v365 = vld [vmem:[%s3 + $0x9c] sm:$0xf]
  %v366 = vld [vmem:[%s3 + $0xa0] sm:$0xf]
  %v367 = vld [vmem:[%s3 + $0xa4] sm:$0xf]
  %v368 = vld [vmem:[%s3 + $0xa8] sm:$0xf]
  %v369 = vld [vmem:[%s3 + $0xac] sm:$0xf]
  %v370 = vld [vmem:[%s3 + $0xb0] sm:$0xf]
  %v371 = vld [vmem:[%s3 + $0xb4] sm:$0xf]
  %v372 = vld [vmem:[%s3 + $0xb8] sm:$0xf]
  %v373 = vld [vmem:[%s3 + $0xbc] sm:$0xf]
  %v374 = vld [vmem:[%s3 + $0xc0] sm:$0xf]
  %v375 = vld [vmem:[%s3 + $0xc4] sm:$0xf]
  %v376 = vld [vmem:[%s3 + $0xc8] sm:$0xf]
  %v377 = vld [vmem:[%s3 + $0xcc] sm:$0xf]
  %v378 = vld [vmem:[%s3 + $0xd0] sm:$0xf]
  %v379 = vld [vmem:[%s3 + $0xd4] sm:$0xf]
  %v380 = vld [vmem:[%s3 + $0xd8] sm:$0xf]
  %v381 = vld [vmem:[%s3 + $0xdc] sm:$0xf]
  %v382 = vld [vmem:[%s3 + $0xe0] sm:$0xf]
  %v383 = vld [vmem:[%s3 + $0xe4] sm:$0xf]
  %v384 = vld [vmem:[%s3 + $0xe8] sm:$0xf]
  %v385 = vld [vmem:[%s3 + $0xec] sm:$0xf]
  %v386 = vld [vmem:[%s3 + $0xf0] sm:$0xf]
  %v387 = vld [vmem:[%s3 + $0xf4] sm:$0xf]
  %v388 = vld [vmem:[%s3 + $0xf8] sm:$0xf]
  %v389 = vld [vmem:[%s3 + $0xfc] sm:$0xf]
  %v390 = vld [vmem:[%s4] sm:$0x1]
  %v392 = vlaneseq
  %v393 = vshrl.u32 %v392, 7
  %v394 = vsub.s32 0, %v393
  %v395 = vrot.slane %v390, %v394
  %v461 = vunpack.c.l.b16 %v326
  %v462 = vunpack.c.l.b16 %v327
  %v463 = vunpack.c.l.b16 %v328
  %v464 = vunpack.c.l.b16 %v329
  %v465 = vunpack.c.l.b16 %v330
  %v466 = vunpack.c.l.b16 %v331
  %v467 = vunpack.c.l.b16 %v332
  %v468 = vunpack.c.l.b16 %v333
  %v469 = vunpack.c.l.b16 %v334
  %v470 = vunpack.c.l.b16 %v335
  %v471 = vunpack.c.l.b16 %v336
  %v472 = vunpack.c.l.b16 %v337
  %v473 = vunpack.c.l.b16 %v338
  %v474 = vunpack.c.l.b16 %v339
  %v475 = vunpack.c.l.b16 %v340
  %v476 = vunpack.c.l.b16 %v341
  %v477 = vunpack.c.l.b16 %v342
  %v478 = vunpack.c.l.b16 %v343
  %v479 = vunpack.c.l.b16 %v344
  %v480 = vunpack.c.l.b16 %v345
  %v481 = vunpack.c.l.b16 %v346
  %v482 = vunpack.c.l.b16 %v347
  %v483 = vunpack.c.l.b16 %v348
  %v484 = vunpack.c.l.b16 %v349
  %v485 = vunpack.c.l.b16 %v350
  %v486 = vunpack.c.l.b16 %v351
  %v487 = vunpack.c.l.b16 %v352
  %v488 = vunpack.c.l.b16 %v353
  %v489 = vunpack.c.l.b16 %v354
  %v490 = vunpack.c.l.b16 %v355
  %v491 = vunpack.c.l.b16 %v356
  %v492 = vunpack.c.l.b16 %v357
  %v493 = vunpack.c.l.b16 %v358
  %v494 = vunpack.c.l.b16 %v359
  %v495 = vunpack.c.l.b16 %v360
  %v496 = vunpack.c.l.b16 %v361
  %v497 = vunpack.c.l.b16 %v362
  %v498 = vunpack.c.l.b16 %v363
  %v499 = vunpack.c.l.b16 %v364
  %v500 = vunpack.c.l.b16 %v365
  %v501 = vunpack.c.l.b16 %v366
  %v502 = vunpack.c.l.b16 %v367
  %v503 = vunpack.c.l.b16 %v368
  %v504 = vunpack.c.l.b16 %v369
  %v505 = vunpack.c.l.b16 %v370
  %v506 = vunpack.c.l.b16 %v371
  %v507 = vunpack.c.l.b16 %v372
  %v508 = vunpack.c.l.b16 %v373
  %v509 = vunpack.c.l.b16 %v374
  %v510 = vunpack.c.l.b16 %v375
  %v511 = vunpack.c.l.b16 %v376
  %v512 = vunpack.c.l.b16 %v377
  %v513 = vunpack.c.l.b16 %v378
  %v514 = vunpack.c.l.b16 %v379
  %v515 = vunpack.c.l.b16 %v380
  %v516 = vunpack.c.l.b16 %v381
  %v517 = vunpack.c.l.b16 %v382
  %v518 = vunpack.c.l.b16 %v383
  %v519 = vunpack.c.l.b16 %v384
  %v520 = vunpack.c.l.b16 %v385
  %v521 = vunpack.c.l.b16 %v386
  %v522 = vunpack.c.l.b16 %v387
  %v523 = vunpack.c.l.b16 %v388
  %v524 = vunpack.c.l.b16 %v389
  %v525 = vpack.c.b16 %v462, %v461
  %v526 = vpack.c.b16 %v464, %v463
  %v527 = vpack.c.b16 %v466, %v465
  %v528 = vpack.c.b16 %v468, %v467
  %v529 = vpack.c.b16 %v470, %v469
  %v530 = vpack.c.b16 %v472, %v471
  %v531 = vpack.c.b16 %v474, %v473
  %v532 = vpack.c.b16 %v476, %v475
  %v533 = vpack.c.b16 %v478, %v477
  %v534 = vpack.c.b16 %v480, %v479
  %v535 = vpack.c.b16 %v482, %v481
  %v536 = vpack.c.b16 %v484, %v483
  %v537 = vpack.c.b16 %v486, %v485
  %v538 = vpack.c.b16 %v488, %v487
  %v539 = vpack.c.b16 %v490, %v489
  %v540 = vpack.c.b16 %v492, %v491
  %v541 = vpack.c.b16 %v494, %v493
  %v542 = vpack.c.b16 %v496, %v495
  %v543 = vpack.c.b16 %v498, %v497
  %v544 = vpack.c.b16 %v500, %v499
  %v545 = vpack.c.b16 %v502, %v501
  %v546 = vpack.c.b16 %v504, %v503
  %v547 = vpack.c.b16 %v506, %v505
  %v548 = vpack.c.b16 %v508, %v507
  %v549 = vpack.c.b16 %v510, %v509
  %v550 = vpack.c.b16 %v512, %v511
  %v551 = vpack.c.b16 %v514, %v513
  %v552 = vpack.c.b16 %v516, %v515
  %v553 = vpack.c.b16 %v518, %v517
  %v554 = vpack.c.b16 %v520, %v519
  %v555 = vpack.c.b16 %v522, %v521
  %v556 = vpack.c.b16 %v524, %v523
  %589 = vmatprep.subr.bf16.mxu0 0
  %590 = vmatpush1.bf16.msra.mxu0 %v532
  %591 = vmatprep.subr.bf16.mxu0 0
  %592 = vmatpush1.bf16.msra.mxu0 %v531
  %593 = vmatprep.subr.bf16.mxu0 0
  %594 = vmatpush1.bf16.msra.mxu0 %v530
  %595 = vmatprep.subr.bf16.mxu0 0
  %596 = vmatpush1.bf16.msra.mxu0 %v529
  %597 = vmatprep.subr.bf16.mxu0 0
  %598 = vmatpush1.bf16.msra.mxu0 %v528
  %599 = vmatprep.subr.bf16.mxu0 0
  %600 = vmatpush1.bf16.msra.mxu0 %v527
  %601 = vmatprep.subr.bf16.mxu0 0
  %602 = vmatpush1.bf16.msra.mxu0 %v526
  %603 = vmatprep.subr.bf16.mxu0 0
  %604 = vmatpush1.bf16.msra.mxu0 %v525
  %605 = vmatprep.subr.bf16.mxu0 0
  %606 = vmatpush2.bf16.msra.mxu0 %v540
  %607 = vmatprep.subr.bf16.mxu0 0
  %608 = vmatpush2.bf16.msra.mxu0 %v539
  %609 = vmatprep.subr.bf16.mxu0 0
  %610 = vmatpush2.bf16.msra.mxu0 %v538
  %611 = vmatprep.subr.bf16.mxu0 0
  %612 = vmatpush2.bf16.msra.mxu0 %v537
  %613 = vmatprep.subr.bf16.mxu0 0
  %614 = vmatpush2.bf16.msra.mxu0 %v536
  %615 = vmatprep.subr.bf16.mxu0 0
  %616 = vmatpush2.bf16.msra.mxu0 %v535
  %617 = vmatprep.subr.bf16.mxu0 0
  %618 = vmatpush2.bf16.msra.mxu0 %v534
  %619 = vmatprep.subr.bf16.mxu0 0
  %620 = vmatpush2.bf16.msra.mxu0 %v533
  %621 = vmatprep.mubr.bf16.mxu0 %v323
  %622 = vmatmul.mubr.bf16.gmra.mxu0 %v322
  %v623 = vpop.f32.mrf.mxu0
  %v624 = vadd.f32 %v395, %v623
  %v625 = vpop.f32.mrf.mxu0
  %v626 = vpop.f32.mrf.mxu0
  %v627 = vpop.f32.mrf.mxu0
  %628 = vdwg.mxu0
  %629 = vmatprep.subr.bf16.mxu0 0
  %630 = vmatpush1.bf16.msra.mxu0 %v548
  %631 = vmatprep.subr.bf16.mxu0 0
  %632 = vmatpush1.bf16.msra.mxu0 %v547
  %633 = vmatprep.subr.bf16.mxu0 0
  %634 = vmatpush1.bf16.msra.mxu0 %v546
  %635 = vmatprep.subr.bf16.mxu0 0
  %636 = vmatpush1.bf16.msra.mxu0 %v545
  %637 = vmatprep.subr.bf16.mxu0 0
  %638 = vmatpush1.bf16.msra.mxu0 %v544
  %639 = vmatprep.subr.bf16.mxu0 0
  %640 = vmatpush1.bf16.msra.mxu0 %v543
  %641 = vmatprep.subr.bf16.mxu0 0
  %642 = vmatpush1.bf16.msra.mxu0 %v542
  %643 = vmatprep.subr.bf16.mxu0 0
  %644 = vmatpush1.bf16.msra.mxu0 %v541
  %645 = vmatprep.subr.bf16.mxu0 0
  %646 = vmatpush2.bf16.msra.mxu0 %v556
  %647 = vmatprep.subr.bf16.mxu0 0
  %648 = vmatpush2.bf16.msra.mxu0 %v555
  %649 = vmatprep.subr.bf16.mxu0 0
  %650 = vmatpush2.bf16.msra.mxu0 %v554
  %651 = vmatprep.subr.bf16.mxu0 0
  %652 = vmatpush2.bf16.msra.mxu0 %v553
  %653 = vmatprep.subr.bf16.mxu0 0
  %654 = vmatpush2.bf16.msra.mxu0 %v552
  %655 = vmatprep.subr.bf16.mxu0 0
  %656 = vmatpush2.bf16.msra.mxu0 %v551
  %657 = vmatprep.subr.bf16.mxu0 0
  %658 = vmatpush2.bf16.msra.mxu0 %v550
  %659 = vmatprep.subr.bf16.mxu0 0
  %660 = vmatpush2.bf16.msra.mxu0 %v549
  %661 = vmatprep.mubr.bf16.mxu0 %v325
  %662 = vmatmul.mubr.bf16.gmra.mxu0 %v324
  %v663 = vpop.f32.mrf.mxu0
  %v664 = vadd.f32 %v624, %v663
  %v665 = vpop.f32.mrf.mxu0
  %v666 = vpop.f32.mrf.mxu0
  %v667 = vpop.f32.mrf.mxu0
  %668 = vdwg.mxu0
  %669 = vst [vmem:[%s5] sm:$0x3] %v664
  // Predicated region
  $region22: #{actor_critic_forward.11} parent=0 // pred_check
    _
  $region23: #{actor_critic_forward.11} parent=0 // pred_check_branch
    %671 = sbr.rel (0) target = $region25
  $region24: #{actor_critic_forward.11} parent=0 // pred_region
    _
  $region25: #{actor_critic_forward.11} parent=0 // pred_fallthru
    _
  // Predicated region
  $region26: #{actor_critic_forward.11} parent=0 // pred_check
    _
  $region27: #{actor_critic_forward.11} parent=0 // pred_check_branch
    %673 = sbr.rel (0) target = $region29
  $region28: #{actor_critic_forward.11} parent=0 // pred_region
    _
  $region29: #{actor_critic_forward.11} parent=0 // pred_fallthru
    _

</llo_original>
